<compile_context>
chip_gen: v7x
topology: tpu7x:2x2x1
jax: 0.10.0
libtpu: 0.0.40
codegen_flags: <defaults>
</compile_context>

<pallas_src>
import functools
import math

import jax
import jax.numpy as jnp
from jax.experimental import pallas as pl
from jax.experimental.pallas import tpu as pltpu


CFG = dict(vocab=100, max_pos=32, type_vocab=2, hidden=32, heads=2,
           intermediate=64, layers=2, num_labels=3)
_LANE = 128      # lane-dense classifier output width
_OUT_ROWS = 8    # sublane-dense classifier output rows per batch tile
_B_TILE = 1      # batch elements per grid tile (megacore-parallel axis)


# ----------------------------------------------------------------------------
# In-kernel helpers (all f32, VMEM-resident values)
# ----------------------------------------------------------------------------
def _layernorm(x, g, b):
    mu = jnp.mean(x, axis=-1, keepdims=True)
    var = jnp.mean(jnp.square(x - mu), axis=-1, keepdims=True)
    return (x - mu) * jax.lax.rsqrt(var + 1e-12) * g + b


def _gelu_tanh(y):
    # TODO(synk): HF BERT 'gelu' is the erf-exact variant; tanh approx used here.
    return 0.5 * y * (1.0 + jnp.tanh(0.7978845608028654 * (y + 0.044715 * y * y * y)))


# ----------------------------------------------------------------------------
# Single fused kernel: emb-LN -> L encoder layers -> CLS -> classifier
# Grid: (batch_tile b  [parallel],  layer l  [arbitrary / carried])
# ----------------------------------------------------------------------------
def _fused_bert_kernel(
    x_emb_ref, mask_ref, emb_g_ref, emb_b_ref,
    qkv_w_ref, qkv_b_ref, ao_w_ref, ao_b_ref, ln1_g_ref, ln1_b_ref,
    i_w_ref, i_b_ref, o_w_ref, o_b_ref, ln2_g_ref, ln2_b_ref,
    cls_w_ref, cls_b_ref,
    out_ref,
    x_vmem,
    *, BT, S, H, NH, Dh,
):
    l = pl.program_id(1)
    BS = BT * S

    # ---- layer step 0: embedding LayerNorm seeds this tile's activation. ---
    @pl.when(l == 0)
    def _():
        x_vmem[...] = _layernorm(x_emb_ref[...].astype(jnp.float32),
                                 emb_g_ref[...], emb_b_ref[...])

    x = x_vmem[...]                                    # [BS, H] f32 (stays in VMEM)
    xb = x.astype(jnp.bfloat16)                        # bf16 matmul operand
    mask = mask_ref[...]                               # [BT, 1, S] additive key bias

    # ---- fused Q/K/V: one bf16 MXU pass (1/sqrt(Dh) pre-folded into Q). ----
    qkv = (jnp.dot(xb, qkv_w_ref[0], preferred_element_type=jnp.float32)
           + qkv_b_ref[0])                             # [BS, 3H] f32
    q, k, v = qkv[:, :H], qkv[:, H:2 * H], qkv[:, 2 * H:]

    # ---- multi-head self-attention. Per-head score/softmax/context (f32
    # softmax, bf16 matmul inputs), contexts concatenated into one [BS, H]
    # buffer so the output projection is a single K=H matmul. ----------------
    ctx_parts = []
    for h in range(NH):   # TODO(synk): head-batched / flash form at real dims
        sl = slice(h * Dh, (h + 1) * Dh)
        qh = q[:, sl].reshape(BT, S, Dh).astype(jnp.bfloat16)
        kh = k[:, sl].reshape(BT, S, Dh).astype(jnp.bfloat16)
        vh = v[:, sl].reshape(BT, S, Dh).astype(jnp.bfloat16)
        s = jnp.einsum("bqd,bkd->bqk", qh, kh,
                       preferred_element_type=jnp.float32) + mask
        p = jnp.exp(s - jnp.max(s, axis=-1, keepdims=True))
        p = p * pl.reciprocal(jnp.sum(p, axis=-1, keepdims=True), approx=True)
        ctx_h = jnp.einsum("bqk,bkd->bqd", p.astype(jnp.bfloat16), vh,
                           preferred_element_type=jnp.float32)
        ctx_parts.append(ctx_h.reshape(BS, Dh))
    ctx = jnp.concatenate(ctx_parts, axis=-1)          # [BS, H] f32

    # ---- single attention output projection (K = H) + residual + LN1. ------
    attn = (jnp.dot(ctx.astype(jnp.bfloat16), ao_w_ref[0],
                    preferred_element_type=jnp.float32) + ao_b_ref[0])
    x = _layernorm(attn + x, ln1_g_ref[0], ln1_b_ref[0])

    # ---- FFN: GELU(x @ Wi + bi) @ Wo + bo, residual + LN2. ------------------
    inter = _gelu_tanh(jnp.dot(x.astype(jnp.bfloat16), i_w_ref[0],
                               preferred_element_type=jnp.float32) + i_b_ref[0])
    ffn = (jnp.dot(inter.astype(jnp.bfloat16), o_w_ref[0],
                   preferred_element_type=jnp.float32) + o_b_ref[0])
    x = _layernorm(ffn + x, ln2_g_ref[0], ln2_b_ref[0])

    x_vmem[...] = x                                    # carry to the next layer

    # ---- last layer step: classifier head, dense [8, 128] unmasked store. --
    # BT == 1: the CLS token is row 0 of this tile; we run the classifier over
    # the first _OUT_ROWS (sublane-dense) rows and the wrapper keeps row 0.
    # TODO(synk): for BT > 1 gather CLS rows with x_vmem[pl.ds(0, BT, stride=S)].
    @pl.when(l == pl.num_programs(1) - 1)
    def _():
        logits = (jnp.dot(x[:_OUT_ROWS].astype(jnp.bfloat16), cls_w_ref[...],
                          preferred_element_type=jnp.float32) + cls_b_ref[...])
        out_ref[...] = logits.astype(out_ref.dtype)


# ----------------------------------------------------------------------------
# Parameters (deterministic, miniature; layout matches the fused kernel)
# ----------------------------------------------------------------------------
def init_params(key, cfg):
    """Dense weights are [in, out] (transpose of nn.Linear.weight); per-layer
    tensors are stacked along a leading layer axis; Q/K/V are pre-fused."""
    H, I, L = cfg["hidden"], cfg["intermediate"], cfg["layers"]

    def nrm(k, shape):
        return 0.02 * jax.random.normal(k, shape, dtype=jnp.float32)

    ks = iter(jax.random.split(key, 16))
    return {
        "word_emb": nrm(next(ks), (cfg["vocab"], H)),
        "pos_emb": nrm(next(ks), (cfg["max_pos"], H)),
        "type_emb": nrm(next(ks), (cfg["type_vocab"], H)),
        "emb_ln_g": jnp.ones((1, H), jnp.float32),
        "emb_ln_b": jnp.zeros((1, H), jnp.float32),
        "qkv_w": nrm(next(ks), (L, H, 3 * H)),
        "qkv_b": jnp.zeros((L, 1, 3 * H), jnp.float32),
        "ao_w": nrm(next(ks), (L, H, H)),
        "ao_b": jnp.zeros((L, 1, H), jnp.float32),
        "ln1_g": jnp.ones((L, 1, H), jnp.float32),
        "ln1_b": jnp.zeros((L, 1, H), jnp.float32),
        "i_w": nrm(next(ks), (L, H, I)),
        "i_b": jnp.zeros((L, 1, I), jnp.float32),
        "o_w": nrm(next(ks), (L, I, H)),
        "o_b": jnp.zeros((L, 1, H), jnp.float32),
        "ln2_g": jnp.ones((L, 1, H), jnp.float32),
        "ln2_b": jnp.zeros((L, 1, H), jnp.float32),
        "cls_w": nrm(next(ks), (H, cfg["num_labels"])),
        "cls_b": jnp.zeros((cfg["num_labels"],), jnp.float32),
    }


# ----------------------------------------------------------------------------
# Forward wrapper: embedding gather (XLA) + one fused pallas_call
# ----------------------------------------------------------------------------
def specter2_forward(params, text_ids, attention_mask_text, cfg):
    B, S = text_ids.shape
    H, NH, L, I = cfg["hidden"], cfg["heads"], cfg["layers"], cfg["intermediate"]
    Dh = H // NH
    NL = cfg["num_labels"]
    BT = _B_TILE
    assert H % NH == 0 and B % BT == 0 and BT * S >= _OUT_ROWS
    n_bt = B // BT

    # Embedding lookups (token / position / segment) — data-dependent gather
    # kept in XLA.  TODO(synk): token_type_ids assumed all-zero (single segment).
    emb = (params["word_emb"][text_ids]
           + params["pos_emb"][:S][None, :, :]
           + params["type_emb"][0][None, None, :])
    x_emb = emb.reshape(B * S, H).astype(jnp.float32)

    # Additive attention-mask bias over keys, [B, 1, S] (HuggingFace style).
    mask_bias = ((1.0 - attention_mask_text.astype(jnp.float32)) * -1e9
                 ).reshape(B, 1, S)

    # Fold 1/sqrt(Dh) into the Q columns of the fused QKV projection; cast all
    # matmul weights to bf16 (halves weight DMA bytes / VMEM, MXU-native).
    scale = 1.0 / math.sqrt(Dh)
    qkv_w = params["qkv_w"].at[:, :, :H].multiply(scale).astype(jnp.bfloat16)
    qkv_b = params["qkv_b"].at[:, :, :H].multiply(scale)          # stays f32
    ao_w = params["ao_w"].astype(jnp.bfloat16)
    i_w = params["i_w"].astype(jnp.bfloat16)
    o_w = params["o_w"].astype(jnp.bfloat16)

    # Lane-pad the classifier to 128 output lanes (unmasked vst); sliced below.
    cls_w_pad = (jnp.zeros((H, _LANE), jnp.float32)
                 .at[:, :NL].set(params["cls_w"])).astype(jnp.bfloat16)
    cls_b_pad = jnp.zeros((1, _LANE), jnp.float32).at[0, :NL].set(params["cls_b"])

    def per_layer(shape):              # stacked weight, selected by the layer axis
        return pl.BlockSpec((1,) + shape, lambda b, l: (l,) + (0,) * len(shape))

    def shared(shape):                 # identical block for every grid step
        return pl.BlockSpec(shape, lambda b, l: (0,) * len(shape))

    grid_spec = pltpu.PrefetchScalarGridSpec(
        num_scalar_prefetch=0,
        grid=(n_bt, L),                 # (batch tiles [parallel], layers [carried])
        in_specs=[
            pl.BlockSpec((BT * S, H), lambda b, l: (b, 0)),    # x_emb (per tile)
            pl.BlockSpec((BT, 1, S), lambda b, l: (b, 0, 0)),  # mask bias
            shared((1, H)),             # emb_ln_g
            shared((1, H)),             # emb_ln_b
            per_layer((H, 3 * H)),      # qkv_w (bf16)
            per_layer((1, 3 * H)),      # qkv_b
            per_layer((H, H)),          # ao_w (bf16)
            per_layer((1, H)),          # ao_b
            per_layer((1, H)),          # ln1_g
            per_layer((1, H)),          # ln1_b
            per_layer((H, I)),          # i_w (bf16)
            per_layer((1, I)),          # i_b
            per_layer((I, H)),          # o_w (bf16)
            per_layer((1, H)),          # o_b
            per_layer((1, H)),          # ln2_g
            per_layer((1, H)),          # ln2_b
            shared((H, _LANE)),         # cls_w (padded, bf16)
            shared((1, _LANE)),         # cls_b (padded)
        ],
        out_specs=pl.BlockSpec((_OUT_ROWS, _LANE), lambda b, l: (b, 0)),
        scratch_shapes=[pltpu.VMEM((BT * S, H), jnp.float32)],
    )

    logits_pad = pl.pallas_call(
        functools.partial(_fused_bert_kernel, BT=BT, S=S, H=H, NH=NH, Dh=Dh),
        grid_spec=grid_spec,
        out_shape=jax.ShapeDtypeStruct((n_bt * _OUT_ROWS, _LANE), jnp.float32),
        compiler_params=pltpu.CompilerParams(
            # Batch tiles are independent (v7x megacore); the layer axis
            # carries state through the VMEM scratch -> sequential.
            dimension_semantics=("parallel", "arbitrary"),
            # Raise the scoped VMEM limit above the per-chip defaults; at real
            # specter2 dims this (and bf16 weights) is what keeps the
            # double-buffered per-layer working set pipelineable.
            vmem_limit_bytes=48 * 1024 * 1024),
    )(x_emb, mask_bias,
      params["emb_ln_g"], params["emb_ln_b"],
      qkv_w, qkv_b, ao_w, params["ao_b"],
      params["ln1_g"], params["ln1_b"], i_w, params["i_b"],
      o_w, params["o_b"], params["ln2_g"], params["ln2_b"],
      cls_w_pad, cls_b_pad)

    # Dropout is identity at inference.  Row 0 of each batch tile's 8-row
    # block is the CLS logits; strip the sublane/lane padding -> raw logits.
    return logits_pad.reshape(n_bt, _OUT_ROWS, _LANE)[:, 0, :NL]


if __name__ == "__main__":
    key = jax.random.PRNGKey(0)
    pkey, ikey = jax.random.split(key)
    params = init_params(pkey, CFG)

    B, S = 2, 8
    text_ids = jax.random.randint(ikey, (B, S), 0, CFG["vocab"], dtype=jnp.int32)
    attention_mask_text = jnp.array(
        [[1, 1, 1, 1, 1, 1, 1, 1],
         [1, 1, 1, 1, 1, 0, 0, 0]], dtype=jnp.int32)

    forward = jax.jit(functools.partial(specter2_forward, cfg=CFG))
    logits = jax.block_until_ready(forward(params, text_ids, attention_mask_text))

    assert logits.shape == (B, CFG["num_labels"])
    assert bool(jnp.all(jnp.isfinite(logits)))
    print("KERNEL_OK")
</pallas_src>

<mosaic_0001>
module attributes {stable_mosaic.version = 11 : i64} {
  func.func @_fused_bert_kernel(%arg0: i32, %arg1: i32, %arg2: memref<8x32xf32, #tpu.memory_space<vmem>>, %arg3: memref<1x1x8xf32, #tpu.memory_space<vmem>>, %arg4: memref<1x32xf32, #tpu.memory_space<vmem>>, %arg5: memref<1x32xf32, #tpu.memory_space<vmem>>, %arg6: memref<1x32x96xbf16, #tpu.memory_space<vmem>>, %arg7: memref<1x1x96xf32, #tpu.memory_space<vmem>>, %arg8: memref<1x32x32xbf16, #tpu.memory_space<vmem>>, %arg9: memref<1x1x32xf32, #tpu.memory_space<vmem>>, %arg10: memref<1x1x32xf32, #tpu.memory_space<vmem>>, %arg11: memref<1x1x32xf32, #tpu.memory_space<vmem>>, %arg12: memref<1x32x64xbf16, #tpu.memory_space<vmem>>, %arg13: memref<1x1x64xf32, #tpu.memory_space<vmem>>, %arg14: memref<1x64x32xbf16, #tpu.memory_space<vmem>>, %arg15: memref<1x1x32xf32, #tpu.memory_space<vmem>>, %arg16: memref<1x1x32xf32, #tpu.memory_space<vmem>>, %arg17: memref<1x1x32xf32, #tpu.memory_space<vmem>>, %arg18: memref<32x128xbf16, #tpu.memory_space<vmem>>, %arg19: memref<1x128xf32, #tpu.memory_space<vmem>>, %arg20: memref<8x128xf32, #tpu.memory_space<vmem>>, %arg21: memref<8x32xf32, #tpu.memory_space<vmem>>) attributes {dimension_semantics = [#tpu.dimension_semantics<parallel>, #tpu.dimension_semantics<arbitrary>], iteration_bounds = array<i64: 2, 2>, scalar_prefetch = 0 : i64, scratch_operands = 1 : i64, tpu.core_type = #tpu.core_type<tc>, window_params = [{transform_indices = @transform_0, window_bounds = array<i64: 8, 32>}, {transform_indices = @transform_1, window_bounds = array<i64: 1, 1, 8>}, {pipeline_mode = #tpu.pipeline_mode<synchronous>, transform_indices = @transform_2, window_bounds = array<i64: 1, 32>}, {pipeline_mode = #tpu.pipeline_mode<synchronous>, transform_indices = @transform_3, window_bounds = array<i64: 1, 32>}, {transform_indices = @transform_4, window_bounds = array<i64: 1, 32, 96>}, {transform_indices = @transform_5, window_bounds = array<i64: 1, 1, 96>}, {transform_indices = @transform_6, window_bounds = array<i64: 1, 32, 32>}, {transform_indices = @transform_7, window_bounds = array<i64: 1, 1, 32>}, {transform_indices = @transform_8, window_bounds = array<i64: 1, 1, 32>}, {transform_indices = @transform_9, window_bounds = array<i64: 1, 1, 32>}, {transform_indices = @transform_10, window_bounds = array<i64: 1, 32, 64>}, {transform_indices = @transform_11, window_bounds = array<i64: 1, 1, 64>}, {transform_indices = @transform_12, window_bounds = array<i64: 1, 64, 32>}, {transform_indices = @transform_13, window_bounds = array<i64: 1, 1, 32>}, {transform_indices = @transform_14, window_bounds = array<i64: 1, 1, 32>}, {transform_indices = @transform_15, window_bounds = array<i64: 1, 1, 32>}, {pipeline_mode = #tpu.pipeline_mode<synchronous>, transform_indices = @transform_16, window_bounds = array<i64: 32, 128>}, {pipeline_mode = #tpu.pipeline_mode<synchronous>, transform_indices = @transform_17, window_bounds = array<i64: 1, 128>}, {transform_indices = @transform_18, window_bounds = array<i64: 8, 128>}]} {
    %c0_i32 = arith.constant 0 : i32
    %0 = arith.cmpi eq, %arg1, %c0_i32 : i32
    %1 = arith.extui %0 : i1 to i32
    %c0_i32_0 = arith.constant 0 : i32
    %2 = arith.cmpi ne, %1, %c0_i32_0 : i32
    scf.if %2 {
      %c0_69 = arith.constant 0 : index
      %c0_70 = arith.constant 0 : index
      %162 = vector.load %arg2[%c0_69, %c0_70] : memref<8x32xf32, #tpu.memory_space<vmem>>, vector<8x32xf32>
      %c0_71 = arith.constant 0 : index
      %c0_72 = arith.constant 0 : index
      %163 = vector.load %arg4[%c0_71, %c0_72] : memref<1x32xf32, #tpu.memory_space<vmem>>, vector<1x32xf32>
      %c0_73 = arith.constant 0 : index
      %c0_74 = arith.constant 0 : index
      %164 = vector.load %arg5[%c0_73, %c0_74] : memref<1x32xf32, #tpu.memory_space<vmem>>, vector<1x32xf32>
      %cst_75 = arith.constant dense<0.000000e+00> : vector<8xf32>
      %165 = vector.multi_reduction <add>, %162, %cst_75 [1] : vector<8x32xf32> to vector<8xf32>
      %166 = vector.shape_cast %165 : vector<8xf32> to vector<8x1xf32>
      %cst_76 = arith.constant 3.200000e+01 : f32
      %167 = vector.broadcast %cst_76 : f32 to vector<8x1xf32>
      %168 = arith.divf %166, %167 : vector<8x1xf32>
      %169 = vector.broadcast %168 : vector<8x1xf32> to vector<8x32xf32>
      %170 = arith.subf %162, %169 : vector<8x32xf32>
      %171 = arith.mulf %170, %170 : vector<8x32xf32>
      %cst_77 = arith.constant dense<0.000000e+00> : vector<8xf32>
      %172 = vector.multi_reduction <add>, %171, %cst_77 [1] : vector<8x32xf32> to vector<8xf32>
      %173 = vector.shape_cast %172 : vector<8xf32> to vector<8x1xf32>
      %cst_78 = arith.constant 3.200000e+01 : f32
      %174 = vector.broadcast %cst_78 : f32 to vector<8x1xf32>
      %175 = arith.divf %173, %174 : vector<8x1xf32>
      %176 = vector.broadcast %168 : vector<8x1xf32> to vector<8x32xf32>
      %177 = arith.subf %162, %176 : vector<8x32xf32>
      %cst_79 = arith.constant 9.99999996E-13 : f32
      %178 = vector.broadcast %cst_79 : f32 to vector<8x1xf32>
      %179 = arith.addf %175, %178 : vector<8x1xf32>
      %180 = math.rsqrt %179 : vector<8x1xf32>
      %181 = vector.broadcast %180 : vector<8x1xf32> to vector<8x32xf32>
      %182 = arith.mulf %177, %181 : vector<8x32xf32>
      %183 = vector.broadcast %163 : vector<1x32xf32> to vector<8x32xf32>
      %184 = arith.mulf %182, %183 : vector<8x32xf32>
      %185 = vector.broadcast %164 : vector<1x32xf32> to vector<8x32xf32>
      %186 = arith.addf %184, %185 : vector<8x32xf32>
      %c0_80 = arith.constant 0 : index
      %c0_81 = arith.constant 0 : index
      %187 = vector.load %arg21[%c0_80, %c0_81] : memref<8x32xf32, #tpu.memory_space<vmem>>, vector<8x32xf32>
      tpu.vector_store %arg21[%c0_80, %c0_81], %186 {strides = array<i32>} : memref<8x32xf32, #tpu.memory_space<vmem>>, vector<8x32xf32>,
    } else {
    }
    %c0 = arith.constant 0 : index
    %c0_1 = arith.constant 0 : index
    %3 = vector.load %arg21[%c0, %c0_1] : memref<8x32xf32, #tpu.memory_space<vmem>>, vector<8x32xf32>
    %4 = arith.truncf %3 : vector<8x32xf32> to vector<8x32xbf16>
    %c0_2 = arith.constant 0 : index
    %c0_3 = arith.constant 0 : index
    %c0_4 = arith.constant 0 : index
    %5 = vector.load %arg3[%c0_2, %c0_3, %c0_4] : memref<1x1x8xf32, #tpu.memory_space<vmem>>, vector<1x1x8xf32>
    %c0_5 = arith.constant 0 : index
    %c0_6 = arith.constant 0 : index
    %c0_7 = arith.constant 0 : index
    %6 = vector.load %arg6[%c0_5, %c0_6, %c0_7] : memref<1x32x96xbf16, #tpu.memory_space<vmem>>, vector<1x32x96xbf16>
    %7 = vector.shape_cast %6 : vector<1x32x96xbf16> to vector<32x96xbf16>
    %cst = arith.constant dense<0.000000e+00> : vector<8x96xf32>
    %8 = tpu.matmul %4, %7, %cst {dimension_numbers = #tpu.dot_dimension_numbers<[1], [0], [0], [1], [0, 0, 1, 1], [], []>} : vector<8x32xbf16>, vector<32x96xbf16>, vector<8x96xf32> -> vector<8x96xf32>
    %c0_8 = arith.constant 0 : index
    %c0_9 = arith.constant 0 : index
    %c0_10 = arith.constant 0 : index
    %9 = vector.load %arg7[%c0_8, %c0_9, %c0_10] : memref<1x1x96xf32, #tpu.memory_space<vmem>>, vector<1x1x96xf32>
    %10 = vector.shape_cast %9 : vector<1x1x96xf32> to vector<1x96xf32>
    %11 = vector.broadcast %10 : vector<1x96xf32> to vector<8x96xf32>
    %12 = arith.addf %8, %11 : vector<8x96xf32>
    %13 = vector.extract_strided_slice %12 {offsets = [0, 0], sizes = [8, 32], strides = [1, 1]} : vector<8x96xf32> to vector<8x32xf32>
    %14 = vector.extract_strided_slice %12 {offsets = [0, 32], sizes = [8, 32], strides = [1, 1]} : vector<8x96xf32> to vector<8x32xf32>
    %15 = vector.extract_strided_slice %12 {offsets = [0, 64], sizes = [8, 32], strides = [1, 1]} : vector<8x96xf32> to vector<8x32xf32>
    %16 = vector.extract_strided_slice %13 {offsets = [0, 0], sizes = [8, 16], strides = [1, 1]} : vector<8x32xf32> to vector<8x16xf32>
    %17 = vector.shape_cast %16 : vector<8x16xf32> to vector<1x8x16xf32>
    %18 = arith.truncf %17 : vector<1x8x16xf32> to vector<1x8x16xbf16>
    %19 = vector.extract_strided_slice %14 {offsets = [0, 0], sizes = [8, 16], strides = [1, 1]} : vector<8x32xf32> to vector<8x16xf32>
    %20 = vector.shape_cast %19 : vector<8x16xf32> to vector<1x8x16xf32>
    %21 = arith.truncf %20 : vector<1x8x16xf32> to vector<1x8x16xbf16>
    %22 = vector.extract_strided_slice %15 {offsets = [0, 0], sizes = [8, 16], strides = [1, 1]} : vector<8x32xf32> to vector<8x16xf32>
    %23 = vector.shape_cast %22 : vector<8x16xf32> to vector<1x8x16xf32>
    %24 = arith.truncf %23 : vector<1x8x16xf32> to vector<1x8x16xbf16>
    "tpu.trace_start"() <{level = 10 : i32, message = "bqd,bkd->bqk"}> : () -> ()
    %cst_11 = arith.constant dense<0.000000e+00> : vector<1x8x8xf32>
    %25 = tpu.matmul %18, %21, %cst_11 {dimension_numbers = #tpu.dot_dimension_numbers<[2], [2], [1], [1], [0, 0, 0, 1, 1, 1], [0], [0]>} : vector<1x8x16xbf16>, vector<1x8x16xbf16>, vector<1x8x8xf32> -> vector<1x8x8xf32>
    "tpu.trace_stop"() : () -> ()
    %26 = vector.broadcast %5 : vector<1x1x8xf32> to vector<1x8x8xf32>
    %27 = arith.addf %25, %26 : vector<1x8x8xf32>
    %cst_12 = arith.constant dense<0xFF800000> : vector<1x8xf32>
    %28 = vector.multi_reduction <maximumf>, %27, %cst_12 [2] : vector<1x8x8xf32> to vector<1x8xf32>
    %29 = vector.shape_cast %28 : vector<1x8xf32> to vector<1x8x1xf32>
    %30 = vector.broadcast %29 : vector<1x8x1xf32> to vector<1x8x8xf32>
    %31 = arith.subf %27, %30 : vector<1x8x8xf32>
    %32 = math.exp %31 : vector<1x8x8xf32>
    %cst_13 = arith.constant dense<0.000000e+00> : vector<1x8xf32>
    %33 = vector.multi_reduction <add>, %32, %cst_13 [2] : vector<1x8x8xf32> to vector<1x8xf32>
    %34 = vector.shape_cast %33 : vector<1x8xf32> to vector<1x8x1xf32>
    %35 = tpu.reciprocal %34 {approx = true} : vector<1x8x1xf32> -> vector<1x8x1xf32>
    %36 = vector.broadcast %35 : vector<1x8x1xf32> to vector<1x8x8xf32>
    %37 = arith.mulf %32, %36 : vector<1x8x8xf32>
    %38 = arith.truncf %37 : vector<1x8x8xf32> to vector<1x8x8xbf16>
    "tpu.trace_start"() <{level = 10 : i32, message = "bqk,bkd->bqd"}> : () -> ()
    %cst_14 = arith.constant dense<0.000000e+00> : vector<1x8x16xf32>
    %39 = tpu.matmul %38, %24, %cst_14 {dimension_numbers = #tpu.dot_dimension_numbers<[2], [1], [1], [2], [0, 0, 0, 1, 1, 2], [0], [0]>} : vector<1x8x8xbf16>, vector<1x8x16xbf16>, vector<1x8x16xf32> -> vector<1x8x16xf32>
    "tpu.trace_stop"() : () -> ()
    %40 = vector.shape_cast %39 : vector<1x8x16xf32> to vector<8x16xf32>
    %41 = vector.extract_strided_slice %13 {offsets = [0, 16], sizes = [8, 16], strides = [1, 1]} : vector<8x32xf32> to vector<8x16xf32>
    %42 = vector.shape_cast %41 : vector<8x16xf32> to vector<1x8x16xf32>
    %43 = arith.truncf %42 : vector<1x8x16xf32> to vector<1x8x16xbf16>
    %44 = vector.extract_strided_slice %14 {offsets = [0, 16], sizes = [8, 16], strides = [1, 1]} : vector<8x32xf32> to vector<8x16xf32>
    %45 = vector.shape_cast %44 : vector<8x16xf32> to vector<1x8x16xf32>
    %46 = arith.truncf %45 : vector<1x8x16xf32> to vector<1x8x16xbf16>
    %47 = vector.extract_strided_slice %15 {offsets = [0, 16], sizes = [8, 16], strides = [1, 1]} : vector<8x32xf32> to vector<8x16xf32>
    %48 = vector.shape_cast %47 : vector<8x16xf32> to vector<1x8x16xf32>
    %49 = arith.truncf %48 : vector<1x8x16xf32> to vector<1x8x16xbf16>
    "tpu.trace_start"() <{level = 10 : i32, message = "bqd,bkd->bqk"}> : () -> ()
    %cst_15 = arith.constant dense<0.000000e+00> : vector<1x8x8xf32>
    %50 = tpu.matmul %43, %46, %cst_15 {dimension_numbers = #tpu.dot_dimension_numbers<[2], [2], [1], [1], [0, 0, 0, 1, 1, 1], [0], [0]>} : vector<1x8x16xbf16>, vector<1x8x16xbf16>, vector<1x8x8xf32> -> vector<1x8x8xf32>
    "tpu.trace_stop"() : () -> ()
    %51 = vector.broadcast %5 : vector<1x1x8xf32> to vector<1x8x8xf32>
    %52 = arith.addf %50, %51 : vector<1x8x8xf32>
    %cst_16 = arith.constant dense<0xFF800000> : vector<1x8xf32>
    %53 = vector.multi_reduction <maximumf>, %52, %cst_16 [2] : vector<1x8x8xf32> to vector<1x8xf32>
    %54 = vector.shape_cast %53 : vector<1x8xf32> to vector<1x8x1xf32>
    %55 = vector.broadcast %54 : vector<1x8x1xf32> to vector<1x8x8xf32>
    %56 = arith.subf %52, %55 : vector<1x8x8xf32>
    %57 = math.exp %56 : vector<1x8x8xf32>
    %cst_17 = arith.constant dense<0.000000e+00> : vector<1x8xf32>
    %58 = vector.multi_reduction <add>, %57, %cst_17 [2] : vector<1x8x8xf32> to vector<1x8xf32>
    %59 = vector.shape_cast %58 : vector<1x8xf32> to vector<1x8x1xf32>
    %60 = tpu.reciprocal %59 {approx = true} : vector<1x8x1xf32> -> vector<1x8x1xf32>
    %61 = vector.broadcast %60 : vector<1x8x1xf32> to vector<1x8x8xf32>
    %62 = arith.mulf %57, %61 : vector<1x8x8xf32>
    %63 = arith.truncf %62 : vector<1x8x8xf32> to vector<1x8x8xbf16>
    "tpu.trace_start"() <{level = 10 : i32, message = "bqk,bkd->bqd"}> : () -> ()
    %cst_18 = arith.constant dense<0.000000e+00> : vector<1x8x16xf32>
    %64 = tpu.matmul %63, %49, %cst_18 {dimension_numbers = #tpu.dot_dimension_numbers<[2], [1], [1], [2], [0, 0, 0, 1, 1, 2], [0], [0]>} : vector<1x8x8xbf16>, vector<1x8x16xbf16>, vector<1x8x16xf32> -> vector<1x8x16xf32>
    "tpu.trace_stop"() : () -> ()
    %65 = vector.shape_cast %64 : vector<1x8x16xf32> to vector<8x16xf32>
    %66 = tpu.concatenate %40, %65 in 1 : vector<8x16xf32>, vector<8x16xf32> -> vector<8x32xf32>
    %67 = arith.truncf %66 : vector<8x32xf32> to vector<8x32xbf16>
    %c0_19 = arith.constant 0 : index
    %c0_20 = arith.constant 0 : index
    %c0_21 = arith.constant 0 : index
    %68 = vector.load %arg8[%c0_19, %c0_20, %c0_21] : memref<1x32x32xbf16, #tpu.memory_space<vmem>>, vector<1x32x32xbf16>
    %69 = vector.shape_cast %68 : vector<1x32x32xbf16> to vector<32x32xbf16>
    %cst_22 = arith.constant dense<0.000000e+00> : vector<8x32xf32>
    %70 = tpu.matmul %67, %69, %cst_22 {dimension_numbers = #tpu.dot_dimension_numbers<[1], [0], [0], [1], [0, 0, 1, 1], [], []>} : vector<8x32xbf16>, vector<32x32xbf16>, vector<8x32xf32> -> vector<8x32xf32>
    %c0_23 = arith.constant 0 : index
    %c0_24 = arith.constant 0 : index
    %c0_25 = arith.constant 0 : index
    %71 = vector.load %arg9[%c0_23, %c0_24, %c0_25] : memref<1x1x32xf32, #tpu.memory_space<vmem>>, vector<1x1x32xf32>
    %72 = vector.shape_cast %71 : vector<1x1x32xf32> to vector<1x32xf32>
    %73 = vector.broadcast %72 : vector<1x32xf32> to vector<8x32xf32>
    %74 = arith.addf %70, %73 : vector<8x32xf32>
    %75 = arith.addf %74, %3 : vector<8x32xf32>
    %c0_26 = arith.constant 0 : index
    %c0_27 = arith.constant 0 : index
    %c0_28 = arith.constant 0 : index
    %76 = vector.load %arg10[%c0_26, %c0_27, %c0_28] : memref<1x1x32xf32, #tpu.memory_space<vmem>>, vector<1x1x32xf32>
    %77 = vector.shape_cast %76 : vector<1x1x32xf32> to vector<1x32xf32>
    %c0_29 = arith.constant 0 : index
    %c0_30 = arith.constant 0 : index
    %c0_31 = arith.constant 0 : index
    %78 = vector.load %arg11[%c0_29, %c0_30, %c0_31] : memref<1x1x32xf32, #tpu.memory_space<vmem>>, vector<1x1x32xf32>
    %79 = vector.shape_cast %78 : vector<1x1x32xf32> to vector<1x32xf32>
    %cst_32 = arith.constant dense<0.000000e+00> : vector<8xf32>
    %80 = vector.multi_reduction <add>, %75, %cst_32 [1] : vector<8x32xf32> to vector<8xf32>
    %81 = vector.shape_cast %80 : vector<8xf32> to vector<8x1xf32>
    %cst_33 = arith.constant 3.200000e+01 : f32
    %82 = vector.broadcast %cst_33 : f32 to vector<8x1xf32>
    %83 = arith.divf %81, %82 : vector<8x1xf32>
    %84 = vector.broadcast %83 : vector<8x1xf32> to vector<8x32xf32>
    %85 = arith.subf %75, %84 : vector<8x32xf32>
    %86 = arith.mulf %85, %85 : vector<8x32xf32>
    %cst_34 = arith.constant dense<0.000000e+00> : vector<8xf32>
    %87 = vector.multi_reduction <add>, %86, %cst_34 [1] : vector<8x32xf32> to vector<8xf32>
    %88 = vector.shape_cast %87 : vector<8xf32> to vector<8x1xf32>
    %cst_35 = arith.constant 3.200000e+01 : f32
    %89 = vector.broadcast %cst_35 : f32 to vector<8x1xf32>
    %90 = arith.divf %88, %89 : vector<8x1xf32>
    %91 = vector.broadcast %83 : vector<8x1xf32> to vector<8x32xf32>
    %92 = arith.subf %75, %91 : vector<8x32xf32>
    %cst_36 = arith.constant 9.99999996E-13 : f32
    %93 = vector.broadcast %cst_36 : f32 to vector<8x1xf32>
    %94 = arith.addf %90, %93 : vector<8x1xf32>
    %95 = math.rsqrt %94 : vector<8x1xf32>
    %96 = vector.broadcast %95 : vector<8x1xf32> to vector<8x32xf32>
    %97 = arith.mulf %92, %96 : vector<8x32xf32>
    %98 = vector.broadcast %77 : vector<1x32xf32> to vector<8x32xf32>
    %99 = arith.mulf %97, %98 : vector<8x32xf32>
    %100 = vector.broadcast %79 : vector<1x32xf32> to vector<8x32xf32>
    %101 = arith.addf %99, %100 : vector<8x32xf32>
    %102 = arith.truncf %101 : vector<8x32xf32> to vector<8x32xbf16>
    %c0_37 = arith.constant 0 : index
    %c0_38 = arith.constant 0 : index
    %c0_39 = arith.constant 0 : index
    %103 = vector.load %arg12[%c0_37, %c0_38, %c0_39] : memref<1x32x64xbf16, #tpu.memory_space<vmem>>, vector<1x32x64xbf16>
    %104 = vector.shape_cast %103 : vector<1x32x64xbf16> to vector<32x64xbf16>
    %cst_40 = arith.constant dense<0.000000e+00> : vector<8x64xf32>
    %105 = tpu.matmul %102, %104, %cst_40 {dimension_numbers = #tpu.dot_dimension_numbers<[1], [0], [0], [1], [0, 0, 1, 1], [], []>} : vector<8x32xbf16>, vector<32x64xbf16>, vector<8x64xf32> -> vector<8x64xf32>
    %c0_41 = arith.constant 0 : index
    %c0_42 = arith.constant 0 : index
    %c0_43 = arith.constant 0 : index
    %106 = vector.load %arg13[%c0_41, %c0_42, %c0_43] : memref<1x1x64xf32, #tpu.memory_space<vmem>>, vector<1x1x64xf32>
    %107 = vector.shape_cast %106 : vector<1x1x64xf32> to vector<1x64xf32>
    %108 = vector.broadcast %107 : vector<1x64xf32> to vector<8x64xf32>
    %109 = arith.addf %105, %108 : vector<8x64xf32>
    %cst_44 = arith.constant 5.000000e-01 : f32
    %110 = vector.broadcast %cst_44 : f32 to vector<8x64xf32>
    %111 = arith.mulf %110, %109 : vector<8x64xf32>
    %cst_45 = arith.constant 4.471500e-02 : f32
    %112 = vector.broadcast %cst_45 : f32 to vector<8x64xf32>
    %113 = arith.mulf %112, %109 : vector<8x64xf32>
    %114 = arith.mulf %113, %109 : vector<8x64xf32>
    %115 = arith.mulf %114, %109 : vector<8x64xf32>
    %116 = arith.addf %109, %115 : vector<8x64xf32>
    %cst_46 = arith.constant 0.797884583 : f32
    %117 = vector.broadcast %cst_46 : f32 to vector<8x64xf32>
    %118 = arith.mulf %117, %116 : vector<8x64xf32>
    %119 = math.tanh %118 : vector<8x64xf32>
    %cst_47 = arith.constant 1.000000e+00 : f32
    %120 = vector.broadcast %cst_47 : f32 to vector<8x64xf32>
    %121 = arith.addf %120, %119 : vector<8x64xf32>
    %122 = arith.mulf %111, %121 : vector<8x64xf32>
    %123 = arith.truncf %122 : vector<8x64xf32> to vector<8x64xbf16>
    %c0_48 = arith.constant 0 : index
    %c0_49 = arith.constant 0 : index
    %c0_50 = arith.constant 0 : index
    %124 = vector.load %arg14[%c0_48, %c0_49, %c0_50] : memref<1x64x32xbf16, #tpu.memory_space<vmem>>, vector<1x64x32xbf16>
    %125 = vector.shape_cast %124 : vector<1x64x32xbf16> to vector<64x32xbf16>
    %cst_51 = arith.constant dense<0.000000e+00> : vector<8x32xf32>
    %126 = tpu.matmul %123, %125, %cst_51 {dimension_numbers = #tpu.dot_dimension_numbers<[1], [0], [0], [1], [0, 0, 1, 1], [], []>} : vector<8x64xbf16>, vector<64x32xbf16>, vector<8x32xf32> -> vector<8x32xf32>
    %c0_52 = arith.constant 0 : index
    %c0_53 = arith.constant 0 : index
    %c0_54 = arith.constant 0 : index
    %127 = vector.load %arg15[%c0_52, %c0_53, %c0_54] : memref<1x1x32xf32, #tpu.memory_space<vmem>>, vector<1x1x32xf32>
    %128 = vector.shape_cast %127 : vector<1x1x32xf32> to vector<1x32xf32>
    %129 = vector.broadcast %128 : vector<1x32xf32> to vector<8x32xf32>
    %130 = arith.addf %126, %129 : vector<8x32xf32>
    %131 = arith.addf %130, %101 : vector<8x32xf32>
    %c0_55 = arith.constant 0 : index
    %c0_56 = arith.constant 0 : index
    %c0_57 = arith.constant 0 : index
    %132 = vector.load %arg16[%c0_55, %c0_56, %c0_57] : memref<1x1x32xf32, #tpu.memory_space<vmem>>, vector<1x1x32xf32>
    %133 = vector.shape_cast %132 : vector<1x1x32xf32> to vector<1x32xf32>
    %c0_58 = arith.constant 0 : index
    %c0_59 = arith.constant 0 : index
    %c0_60 = arith.constant 0 : index
    %134 = vector.load %arg17[%c0_58, %c0_59, %c0_60] : memref<1x1x32xf32, #tpu.memory_space<vmem>>, vector<1x1x32xf32>
    %135 = vector.shape_cast %134 : vector<1x1x32xf32> to vector<1x32xf32>
    %cst_61 = arith.constant dense<0.000000e+00> : vector<8xf32>
    %136 = vector.multi_reduction <add>, %131, %cst_61 [1] : vector<8x32xf32> to vector<8xf32>
    %137 = vector.shape_cast %136 : vector<8xf32> to vector<8x1xf32>
    %cst_62 = arith.constant 3.200000e+01 : f32
    %138 = vector.broadcast %cst_62 : f32 to vector<8x1xf32>
    %139 = arith.divf %137, %138 : vector<8x1xf32>
    %140 = vector.broadcast %139 : vector<8x1xf32> to vector<8x32xf32>
    %141 = arith.subf %131, %140 : vector<8x32xf32>
    %142 = arith.mulf %141, %141 : vector<8x32xf32>
    %cst_63 = arith.constant dense<0.000000e+00> : vector<8xf32>
    %143 = vector.multi_reduction <add>, %142, %cst_63 [1] : vector<8x32xf32> to vector<8xf32>
    %144 = vector.shape_cast %143 : vector<8xf32> to vector<8x1xf32>
    %cst_64 = arith.constant 3.200000e+01 : f32
    %145 = vector.broadcast %cst_64 : f32 to vector<8x1xf32>
    %146 = arith.divf %144, %145 : vector<8x1xf32>
    %147 = vector.broadcast %139 : vector<8x1xf32> to vector<8x32xf32>
    %148 = arith.subf %131, %147 : vector<8x32xf32>
    %cst_65 = arith.constant 9.99999996E-13 : f32
    %149 = vector.broadcast %cst_65 : f32 to vector<8x1xf32>
    %150 = arith.addf %146, %149 : vector<8x1xf32>
    %151 = math.rsqrt %150 : vector<8x1xf32>
    %152 = vector.broadcast %151 : vector<8x1xf32> to vector<8x32xf32>
    %153 = arith.mulf %148, %152 : vector<8x32xf32>
    %154 = vector.broadcast %133 : vector<1x32xf32> to vector<8x32xf32>
    %155 = arith.mulf %153, %154 : vector<8x32xf32>
    %156 = vector.broadcast %135 : vector<1x32xf32> to vector<8x32xf32>
    %157 = arith.addf %155, %156 : vector<8x32xf32>
    %c0_66 = arith.constant 0 : index
    %c0_67 = arith.constant 0 : index
    %158 = vector.load %arg21[%c0_66, %c0_67] : memref<8x32xf32, #tpu.memory_space<vmem>>, vector<8x32xf32>
    tpu.vector_store %arg21[%c0_66, %c0_67], %157 {strides = array<i32>} : memref<8x32xf32, #tpu.memory_space<vmem>>, vector<8x32xf32>,
    %c1_i32 = arith.constant 1 : i32
    %159 = arith.cmpi eq, %arg1, %c1_i32 : i32
    %160 = arith.extui %159 : i1 to i32
    %c0_i32_68 = arith.constant 0 : i32
    %161 = arith.cmpi ne, %160, %c0_i32_68 : i32
    scf.if %161 {
      %162 = arith.truncf %157 : vector<8x32xf32> to vector<8x32xbf16>
      %c0_69 = arith.constant 0 : index
      %c0_70 = arith.constant 0 : index
      %163 = vector.load %arg18[%c0_69, %c0_70] : memref<32x128xbf16, #tpu.memory_space<vmem>>, vector<32x128xbf16>
      %cst_71 = arith.constant dense<0.000000e+00> : vector<8x128xf32>
      %164 = tpu.matmul %162, %163, %cst_71 {dimension_numbers = #tpu.dot_dimension_numbers<[1], [0], [0], [1], [0, 0, 1, 1], [], []>} : vector<8x32xbf16>, vector<32x128xbf16>, vector<8x128xf32> -> vector<8x128xf32>
      %c0_72 = arith.constant 0 : index
      %c0_73 = arith.constant 0 : index
      %165 = vector.load %arg19[%c0_72, %c0_73] : memref<1x128xf32, #tpu.memory_space<vmem>>, vector<1x128xf32>
      %166 = vector.broadcast %165 : vector<1x128xf32> to vector<8x128xf32>
      %167 = arith.addf %164, %166 : vector<8x128xf32>
      %c0_74 = arith.constant 0 : index
      %c0_75 = arith.constant 0 : index
      %168 = vector.load %arg20[%c0_74, %c0_75] : memref<8x128xf32, #tpu.memory_space<vmem>>, vector<8x128xf32>
      tpu.vector_store %arg20[%c0_74, %c0_75], %167 {strides = array<i32>} : memref<8x128xf32, #tpu.memory_space<vmem>>, vector<8x128xf32>,
    } else {
    }
    return
  }
  func.func @transform_0(%arg0: i32, %arg1: i32) -> (i32, i32) {
    %c0_i32 = arith.constant 0 : i32
    %c0_i32_0 = arith.constant 0 : i32
    return %arg0, %c0_i32 : i32, i32
  }
  func.func @transform_1(%arg0: i32, %arg1: i32) -> (i32, i32, i32) {
    %c0_i32 = arith.constant 0 : i32
    %c0_i32_0 = arith.constant 0 : i32
    %c0_i32_1 = arith.constant 0 : i32
    return %arg0, %c0_i32, %c0_i32_0 : i32, i32, i32
  }
  func.func @transform_2(%arg0: i32, %arg1: i32) -> (i32, i32) {
    %c0_i32 = arith.constant 0 : i32
    %c0_i32_0 = arith.constant 0 : i32
    %c0_i32_1 = arith.constant 0 : i32
    return %c0_i32, %c0_i32_0 : i32, i32
  }
  func.func @transform_3(%arg0: i32, %arg1: i32) -> (i32, i32) {
    %c0_i32 = arith.constant 0 : i32
    %c0_i32_0 = arith.constant 0 : i32
    %c0_i32_1 = arith.constant 0 : i32
    return %c0_i32, %c0_i32_0 : i32, i32
  }
  func.func @transform_4(%arg0: i32, %arg1: i32) -> (i32, i32, i32) {
    %c0_i32 = arith.constant 0 : i32
    %c0_i32_0 = arith.constant 0 : i32
    %c0_i32_1 = arith.constant 0 : i32
    return %arg1, %c0_i32, %c0_i32_0 : i32, i32, i32
  }
  func.func @transform_5(%arg0: i32, %arg1: i32) -> (i32, i32, i32) {
    %c0_i32 = arith.constant 0 : i32
    %c0_i32_0 = arith.constant 0 : i32
    %c0_i32_1 = arith.constant 0 : i32
    return %arg1, %c0_i32, %c0_i32_0 : i32, i32, i32
  }
  func.func @transform_6(%arg0: i32, %arg1: i32) -> (i32, i32, i32) {
    %c0_i32 = arith.constant 0 : i32
    %c0_i32_0 = arith.constant 0 : i32
    %c0_i32_1 = arith.constant 0 : i32
    return %arg1, %c0_i32, %c0_i32_0 : i32, i32, i32
  }
  func.func @transform_7(%arg0: i32, %arg1: i32) -> (i32, i32, i32) {
    %c0_i32 = arith.constant 0 : i32
    %c0_i32_0 = arith.constant 0 : i32
    %c0_i32_1 = arith.constant 0 : i32
    return %arg1, %c0_i32, %c0_i32_0 : i32, i32, i32
  }
  func.func @transform_8(%arg0: i32, %arg1: i32) -> (i32, i32, i32) {
    %c0_i32 = arith.constant 0 : i32
    %c0_i32_0 = arith.constant 0 : i32
    %c0_i32_1 = arith.constant 0 : i32
    return %arg1, %c0_i32, %c0_i32_0 : i32, i32, i32
  }
  func.func @transform_9(%arg0: i32, %arg1: i32) -> (i32, i32, i32) {
    %c0_i32 = arith.constant 0 : i32
    %c0_i32_0 = arith.constant 0 : i32
    %c0_i32_1 = arith.constant 0 : i32
    return %arg1, %c0_i32, %c0_i32_0 : i32, i32, i32
  }
  func.func @transform_10(%arg0: i32, %arg1: i32) -> (i32, i32, i32) {
    %c0_i32 = arith.constant 0 : i32
    %c0_i32_0 = arith.constant 0 : i32
    %c0_i32_1 = arith.constant 0 : i32
    return %arg1, %c0_i32, %c0_i32_0 : i32, i32, i32
  }
  func.func @transform_11(%arg0: i32, %arg1: i32) -> (i32, i32, i32) {
    %c0_i32 = arith.constant 0 : i32
    %c0_i32_0 = arith.constant 0 : i32
    %c0_i32_1 = arith.constant 0 : i32
    return %arg1, %c0_i32, %c0_i32_0 : i32, i32, i32
  }
  func.func @transform_12(%arg0: i32, %arg1: i32) -> (i32, i32, i32) {
    %c0_i32 = arith.constant 0 : i32
    %c0_i32_0 = arith.constant 0 : i32
    %c0_i32_1 = arith.constant 0 : i32
    return %arg1, %c0_i32, %c0_i32_0 : i32, i32, i32
  }
  func.func @transform_13(%arg0: i32, %arg1: i32) -> (i32, i32, i32) {
    %c0_i32 = arith.constant 0 : i32
    %c0_i32_0 = arith.constant 0 : i32
    %c0_i32_1 = arith.constant 0 : i32
    return %arg1, %c0_i32, %c0_i32_0 : i32, i32, i32
  }
  func.func @transform_14(%arg0: i32, %arg1: i32) -> (i32, i32, i32) {
    %c0_i32 = arith.constant 0 : i32
    %c0_i32_0 = arith.constant 0 : i32
    %c0_i32_1 = arith.constant 0 : i32
    return %arg1, %c0_i32, %c0_i32_0 : i32, i32, i32
  }
  func.func @transform_15(%arg0: i32, %arg1: i32) -> (i32, i32, i32) {
    %c0_i32 = arith.constant 0 : i32
    %c0_i32_0 = arith.constant 0 : i32
    %c0_i32_1 = arith.constant 0 : i32
    return %arg1, %c0_i32, %c0_i32_0 : i32, i32, i32
  }
  func.func @transform_16(%arg0: i32, %arg1: i32) -> (i32, i32) {
    %c0_i32 = arith.constant 0 : i32
    %c0_i32_0 = arith.constant 0 : i32
    %c0_i32_1 = arith.constant 0 : i32
    return %c0_i32, %c0_i32_0 : i32, i32
  }
  func.func @transform_17(%arg0: i32, %arg1: i32) -> (i32, i32) {
    %c0_i32 = arith.constant 0 : i32
    %c0_i32_0 = arith.constant 0 : i32
    %c0_i32_1 = arith.constant 0 : i32
    return %c0_i32, %c0_i32_0 : i32, i32
  }
  func.func @transform_18(%arg0: i32, %arg1: i32) -> (i32, i32) {
    %c0_i32 = arith.constant 0 : i32
    %c0_i32_0 = arith.constant 0 : i32
    return %arg0, %c0_i32 : i32, i32
  }
}

</mosaic_0001>

<llo_original>
// kernel: specter2_forward.1
$region0: #{specter2_forward.1}
  #allocation0 [shape = 'u32[]', space=smem, size = 0x4, offset = 0x4, fixed_abs, tag = 'smem constant byte address 0x4 - core index']
  #allocation1 [shape = 'u32[144,128]{1,0:T(1,128)}', space=vmem, size = 0x12000, scoped, tag = 'internal scratch']
  #allocation2 [shape = 'f32[8,32]{1,0:T(8,128)}', space=vmem, size = 0x1000, scoped, tag = 'scratch operand']
  %s0 = inlined_call_operand.vmem [shape: f32[16,32], index: 0, kind: input, shape index: {}]
  %s1 = inlined_call_operand.vmem [shape: f32[2,1,8], index: 1, kind: input, shape index: {}]
  %s2 = inlined_call_operand.vmem [shape: f32[1,32], index: 2, kind: input, shape index: {}]
  %s3 = inlined_call_operand.vmem [shape: f32[1,32], index: 3, kind: input, shape index: {}]
  %s4 = inlined_call_operand.vmem [shape: bf16[2,32,96], index: 4, kind: input, shape index: {}]
  %s5 = inlined_call_operand.vmem [shape: f32[2,1,96], index: 5, kind: input, shape index: {}]
  %s6 = inlined_call_operand.vmem [shape: bf16[2,32,32], index: 6, kind: input, shape index: {}]
  %s7 = inlined_call_operand.vmem [shape: f32[2,1,32], index: 7, kind: input, shape index: {}]
  %s8 = inlined_call_operand.vmem [shape: f32[2,1,32], index: 8, kind: input, shape index: {}]
  %s9 = inlined_call_operand.vmem [shape: f32[2,1,32], index: 9, kind: input, shape index: {}]
  %s10 = inlined_call_operand.vmem [shape: bf16[2,32,64], index: 10, kind: input, shape index: {}]
  %s11 = inlined_call_operand.vmem [shape: f32[2,1,64], index: 11, kind: input, shape index: {}]
  %s12 = inlined_call_operand.vmem [shape: bf16[2,64,32], index: 12, kind: input, shape index: {}]
  %s13 = inlined_call_operand.vmem [shape: f32[2,1,32], index: 13, kind: input, shape index: {}]
  %s14 = inlined_call_operand.vmem [shape: f32[2,1,32], index: 14, kind: input, shape index: {}]
  %s15 = inlined_call_operand.vmem [shape: f32[2,1,32], index: 15, kind: input, shape index: {}]
  %s16 = inlined_call_operand.vmem [shape: bf16[32,128], index: 16, kind: input, shape index: {}]
  %s17 = inlined_call_operand.vmem [shape: f32[1,128], index: 17, kind: input, shape index: {}]
  %s18 = inlined_call_operand.vmem [shape: f32[16,128], index: 18, kind: output, shape index: {}]
  %s19 = sld [smem:[#allocation0]]
  $region113: #{specter2_forward.1} parent=0
    _
  %s21 = ssub.s32 1, %s19
  %s22 = scalar_select 0, %s21, %s19
  loop: start=0, step=1, limit=6
  $region2: #{specter2_forward.1} parent=0 // loop_pre_header
    _
  $region3: #{specter2_forward.1} parent=0 // loop_header
    %s24 = sphi 0, %s28
    %p25 = scmp.ge.s32.totalorder %s24, 6
    %s31 = sphi 0, %s43
    %s32 = sphi 0, %s39
    %s33 = sphi 0, %s31
    %s34 = sphi 0, %s32
    %s35 = sphi 0, %s33
    %s36 = sphi 0, %s34
    %s46 = sphi 0, %s48
    %s49 = sphi 0, %s46
    %s50 = sphi 0, %s49
    %s66 = sphi 0, %s50
    %s72 = sphi 0, %s74
    %s75 = sphi 0, %s72
    %s76 = sphi 0, %s75
    %s92 = sphi 0, %s76
    %s96 = sphi 0, %s96
    %s98 = sphi 0, %s96
    %s99 = sphi 0, %s98
    %s113 = sphi 0, %s99
    %s117 = sphi 0, %s117
    %s119 = sphi 0, %s117
    %s120 = sphi 0, %s119
    %s134 = sphi 0, %s120
    %s140 = sphi 0, %s142
    %s143 = sphi 0, %s140
    %s144 = sphi 0, %s143
    %s160 = sphi 0, %s144
    %s166 = sphi 0, %s168
    %s169 = sphi 0, %s166
    %s170 = sphi 0, %s169
    %s186 = sphi 0, %s170
    %s192 = sphi 0, %s194
    %s195 = sphi 0, %s192
    %s196 = sphi 0, %s195
    %s212 = sphi 0, %s196
    %s218 = sphi 0, %s220
    %s221 = sphi 0, %s218
    %s222 = sphi 0, %s221
    %s238 = sphi 0, %s222
    %s244 = sphi 0, %s246
    %s247 = sphi 0, %s244
    %s248 = sphi 0, %s247
    %s264 = sphi 0, %s248
    %s270 = sphi 0, %s272
    %s273 = sphi 0, %s270
    %s274 = sphi 0, %s273
    %s290 = sphi 0, %s274
    %s296 = sphi 0, %s298
    %s299 = sphi 0, %s296
    %s300 = sphi 0, %s299
    %s316 = sphi 0, %s300
    %s322 = sphi 0, %s324
    %s325 = sphi 0, %s322
    %s326 = sphi 0, %s325
    %s342 = sphi 0, %s326
    %s348 = sphi 0, %s350
    %s351 = sphi 0, %s348
    %s352 = sphi 0, %s351
    %s368 = sphi 0, %s352
    %s374 = sphi 0, %s376
    %s377 = sphi 0, %s374
    %s378 = sphi 0, %s377
    %s394 = sphi 0, %s378
    %s400 = sphi 0, %s402
    %s403 = sphi 0, %s400
    %s404 = sphi 0, %s403
    %s420 = sphi 0, %s404
    %s426 = sphi 0, %s428
    %s429 = sphi 0, %s426
    %s430 = sphi 0, %s429
    %s446 = sphi 0, %s430
    %s450 = sphi 0, %s450
    %s452 = sphi 0, %s450
    %s453 = sphi 0, %s452
    %s467 = sphi 0, %s453
    %s471 = sphi 0, %s471
    %s473 = sphi 0, %s471
    %s474 = sphi 0, %s473
    %s488 = sphi 0, %s474
    %s494 = sphi 0, %s496
    %s497 = sphi 0, %s494
    %s498 = sphi 0, %s497
    %s514 = sphi 0, %s498
  $region4: #{specter2_forward.1} parent=0 // loop_header_branch
    %27 = sbr.rel (%p25) target = $region8
  $region5: #{specter2_forward.1} parent=0 // loop_body
    %s29 = ssub.s32 %s24, 1
    %s30 = ssub.s32 %s24, 2
    %s37 = sadd.s32 1, %s32
    %p38 = scmp.ge.s32.totalorder %s37, 2
    %s39 = scalar_select %p38, 0, %s37
    %s40 = sadd.s32 1, %s31
    %s41 = scalar_select %p38, %s40, %s31
    %p42 = scmp.ge.s32.totalorder %s41, 2
    %s43 = scalar_select %p42, 0, %s41
    %s44 = ssub.s32 %s31, %s43
    %p45 = scmp.eq.s32.totalorder %s44, 0
    %s47 = sadd.s32 %s46, 1
    %s48 = scalar_select %p45, %s46, %s47
    %p51 = pneg %p45
    %p52 = scmp.eq.s32.totalorder %s24, 3
    %p53 = por %p51, %p52
    %p54 = scmp.ne.s32.totalorder %s46, %s49
    %p55 = scmp.eq.s32.totalorder %s24, 0
    %p56 = por %p54, %p55
    %p57 = scmp.ne.s32.totalorder %s46, %s49
    %p58 = scmp.eq.s32.totalorder %s29, 3
    %p59 = por %p57, %p58
    %p60 = scmp.ne.s32.totalorder %s49, %s50
    %p61 = scmp.eq.s32.totalorder %s29, 0
    %p62 = por %p60, %p61
    %p63 = scmp.ne.s32.totalorder %s49, %s50
    %p64 = scmp.eq.s32.totalorder %s30, 3
    %p65 = por %p63, %p64
    %p67 = scmp.ne.s32.totalorder %s50, %s66
    %p68 = scmp.eq.s32.totalorder %s30, 0
    %p69 = por %p67, %p68
    %s70 = ssub.s32 %s31, %s43
    %p71 = scmp.eq.s32.totalorder %s70, 0
    %s73 = sadd.s32 %s72, 1
    %s74 = scalar_select %p71, %s72, %s73
    %p77 = pneg %p71
    %p78 = scmp.eq.s32.totalorder %s24, 3
    %p79 = por %p77, %p78
    %p80 = scmp.ne.s32.totalorder %s72, %s75
    %p81 = scmp.eq.s32.totalorder %s24, 0
    %p82 = por %p80, %p81
    %p83 = scmp.ne.s32.totalorder %s72, %s75
    %p84 = scmp.eq.s32.totalorder %s29, 3
    %p85 = por %p83, %p84
    %p86 = scmp.ne.s32.totalorder %s75, %s76
    %p87 = scmp.eq.s32.totalorder %s29, 0
    %p88 = por %p86, %p87
    %p89 = scmp.ne.s32.totalorder %s75, %s76
    %p90 = scmp.eq.s32.totalorder %s30, 3
    %p91 = por %p89, %p90
    %p93 = scmp.ne.s32.totalorder %s76, %s92
    %p94 = scmp.eq.s32.totalorder %s30, 0
    %p95 = por %p93, %p94
    %s97 = sadd.s32 %s96, 1
    %p100 = scmp.eq.s32.totalorder %s24, 3
    %p101 = scmp.ne.s32.totalorder %s96, %s98
    %p102 = scmp.eq.s32.totalorder %s24, 0
    %p103 = por %p101, %p102
    %p104 = scmp.ne.s32.totalorder %s96, %s98
    %p105 = scmp.eq.s32.totalorder %s29, 3
    %p106 = por %p104, %p105
    %p107 = scmp.ne.s32.totalorder %s98, %s99
    %p108 = scmp.eq.s32.totalorder %s29, 0
    %p109 = por %p107, %p108
    %p110 = scmp.ne.s32.totalorder %s98, %s99
    %p111 = scmp.eq.s32.totalorder %s30, 3
    %p112 = por %p110, %p111
    %p114 = scmp.ne.s32.totalorder %s99, %s113
    %p115 = scmp.eq.s32.totalorder %s30, 0
    %p116 = por %p114, %p115
    %s118 = sadd.s32 %s117, 1
    %p121 = scmp.eq.s32.totalorder %s24, 3
    %p122 = scmp.ne.s32.totalorder %s117, %s119
    %p123 = scmp.eq.s32.totalorder %s24, 0
    %p124 = por %p122, %p123
    %p125 = scmp.ne.s32.totalorder %s117, %s119
    %p126 = scmp.eq.s32.totalorder %s29, 3
    %p127 = por %p125, %p126
    %p128 = scmp.ne.s32.totalorder %s119, %s120
    %p129 = scmp.eq.s32.totalorder %s29, 0
    %p130 = por %p128, %p129
    %p131 = scmp.ne.s32.totalorder %s119, %s120
    %p132 = scmp.eq.s32.totalorder %s30, 3
    %p133 = por %p131, %p132
    %p135 = scmp.ne.s32.totalorder %s120, %s134
    %p136 = scmp.eq.s32.totalorder %s30, 0
    %p137 = por %p135, %p136
    %s138 = ssub.s32 %s32, %s39
    %p139 = scmp.eq.s32.totalorder %s138, 0
    %s141 = sadd.s32 %s140, 1
    %s142 = scalar_select %p139, %s140, %s141
    %p145 = pneg %p139
    %p146 = scmp.eq.s32.totalorder %s24, 3
    %p147 = por %p145, %p146
    %p148 = scmp.ne.s32.totalorder %s140, %s143
    %p149 = scmp.eq.s32.totalorder %s24, 0
    %p150 = por %p148, %p149
    %p151 = scmp.ne.s32.totalorder %s140, %s143
    %p152 = scmp.eq.s32.totalorder %s29, 3
    %p153 = por %p151, %p152
    %p154 = scmp.ne.s32.totalorder %s143, %s144
    %p155 = scmp.eq.s32.totalorder %s29, 0
    %p156 = por %p154, %p155
    %p157 = scmp.ne.s32.totalorder %s143, %s144
    %p158 = scmp.eq.s32.totalorder %s30, 3
    %p159 = por %p157, %p158
    %p161 = scmp.ne.s32.totalorder %s144, %s160
    %p162 = scmp.eq.s32.totalorder %s30, 0
    %p163 = por %p161, %p162
    %s164 = ssub.s32 %s32, %s39
    %p165 = scmp.eq.s32.totalorder %s164, 0
    %s167 = sadd.s32 %s166, 1
    %s168 = scalar_select %p165, %s166, %s167
    %p171 = pneg %p165
    %p172 = scmp.eq.s32.totalorder %s24, 3
    %p173 = por %p171, %p172
    %p174 = scmp.ne.s32.totalorder %s166, %s169
    %p175 = scmp.eq.s32.totalorder %s24, 0
    %p176 = por %p174, %p175
    %p177 = scmp.ne.s32.totalorder %s166, %s169
    %p178 = scmp.eq.s32.totalorder %s29, 3
    %p179 = por %p177, %p178
    %p180 = scmp.ne.s32.totalorder %s169, %s170
    %p181 = scmp.eq.s32.totalorder %s29, 0
    %p182 = por %p180, %p181
    %p183 = scmp.ne.s32.totalorder %s169, %s170
    %p184 = scmp.eq.s32.totalorder %s30, 3
    %p185 = por %p183, %p184
    %p187 = scmp.ne.s32.totalorder %s170, %s186
    %p188 = scmp.eq.s32.totalorder %s30, 0
    %p189 = por %p187, %p188
    %s190 = ssub.s32 %s32, %s39
    %p191 = scmp.eq.s32.totalorder %s190, 0
    %s193 = sadd.s32 %s192, 1
    %s194 = scalar_select %p191, %s192, %s193
    %p197 = pneg %p191
    %p198 = scmp.eq.s32.totalorder %s24, 3
    %p199 = por %p197, %p198
    %p200 = scmp.ne.s32.totalorder %s192, %s195
    %p201 = scmp.eq.s32.totalorder %s24, 0
    %p202 = por %p200, %p201
    %p203 = scmp.ne.s32.totalorder %s192, %s195
    %p204 = scmp.eq.s32.totalorder %s29, 3
    %p205 = por %p203, %p204
    %p206 = scmp.ne.s32.totalorder %s195, %s196
    %p207 = scmp.eq.s32.totalorder %s29, 0
    %p208 = por %p206, %p207
    %p209 = scmp.ne.s32.totalorder %s195, %s196
    %p210 = scmp.eq.s32.totalorder %s30, 3
    %p211 = por %p209, %p210
    %p213 = scmp.ne.s32.totalorder %s196, %s212
    %p214 = scmp.eq.s32.totalorder %s30, 0
    %p215 = por %p213, %p214
    %s216 = ssub.s32 %s32, %s39
    %p217 = scmp.eq.s32.totalorder %s216, 0
    %s219 = sadd.s32 %s218, 1
    %s220 = scalar_select %p217, %s218, %s219
    %p223 = pneg %p217
    %p224 = scmp.eq.s32.totalorder %s24, 3
    %p225 = por %p223, %p224
    %p226 = scmp.ne.s32.totalorder %s218, %s221
    %p227 = scmp.eq.s32.totalorder %s24, 0
    %p228 = por %p226, %p227
    %p229 = scmp.ne.s32.totalorder %s218, %s221
    %p230 = scmp.eq.s32.totalorder %s29, 3
    %p231 = por %p229, %p230
    %p232 = scmp.ne.s32.totalorder %s221, %s222
    %p233 = scmp.eq.s32.totalorder %s29, 0
    %p234 = por %p232, %p233
    %p235 = scmp.ne.s32.totalorder %s221, %s222
    %p236 = scmp.eq.s32.totalorder %s30, 3
    %p237 = por %p235, %p236
    %p239 = scmp.ne.s32.totalorder %s222, %s238
    %p240 = scmp.eq.s32.totalorder %s30, 0
    %p241 = por %p239, %p240
    %s242 = ssub.s32 %s32, %s39
    %p243 = scmp.eq.s32.totalorder %s242, 0
    %s245 = sadd.s32 %s244, 1
    %s246 = scalar_select %p243, %s244, %s245
    %p249 = pneg %p243
    %p250 = scmp.eq.s32.totalorder %s24, 3
    %p251 = por %p249, %p250
    %p252 = scmp.ne.s32.totalorder %s244, %s247
    %p253 = scmp.eq.s32.totalorder %s24, 0
    %p254 = por %p252, %p253
    %p255 = scmp.ne.s32.totalorder %s244, %s247
    %p256 = scmp.eq.s32.totalorder %s29, 3
    %p257 = por %p255, %p256
    %p258 = scmp.ne.s32.totalorder %s247, %s248
    %p259 = scmp.eq.s32.totalorder %s29, 0
    %p260 = por %p258, %p259
    %p261 = scmp.ne.s32.totalorder %s247, %s248
    %p262 = scmp.eq.s32.totalorder %s30, 3
    %p263 = por %p261, %p262
    %p265 = scmp.ne.s32.totalorder %s248, %s264
    %p266 = scmp.eq.s32.totalorder %s30, 0
    %p267 = por %p265, %p266
    %s268 = ssub.s32 %s32, %s39
    %p269 = scmp.eq.s32.totalorder %s268, 0
    %s271 = sadd.s32 %s270, 1
    %s272 = scalar_select %p269, %s270, %s271
    %p275 = pneg %p269
    %p276 = scmp.eq.s32.totalorder %s24, 3
    %p277 = por %p275, %p276
    %p278 = scmp.ne.s32.totalorder %s270, %s273
    %p279 = scmp.eq.s32.totalorder %s24, 0
    %p280 = por %p278, %p279
    %p281 = scmp.ne.s32.totalorder %s270, %s273
    %p282 = scmp.eq.s32.totalorder %s29, 3
    %p283 = por %p281, %p282
    %p284 = scmp.ne.s32.totalorder %s273, %s274
    %p285 = scmp.eq.s32.totalorder %s29, 0
    %p286 = por %p284, %p285
    %p287 = scmp.ne.s32.totalorder %s273, %s274
    %p288 = scmp.eq.s32.totalorder %s30, 3
    %p289 = por %p287, %p288
    %p291 = scmp.ne.s32.totalorder %s274, %s290
    %p292 = scmp.eq.s32.totalorder %s30, 0
    %p293 = por %p291, %p292
    %s294 = ssub.s32 %s32, %s39
    %p295 = scmp.eq.s32.totalorder %s294, 0
    %s297 = sadd.s32 %s296, 1
    %s298 = scalar_select %p295, %s296, %s297
    %p301 = pneg %p295
    %p302 = scmp.eq.s32.totalorder %s24, 3
    %p303 = por %p301, %p302
    %p304 = scmp.ne.s32.totalorder %s296, %s299
    %p305 = scmp.eq.s32.totalorder %s24, 0
    %p306 = por %p304, %p305
    %p307 = scmp.ne.s32.totalorder %s296, %s299
    %p308 = scmp.eq.s32.totalorder %s29, 3
    %p309 = por %p307, %p308
    %p310 = scmp.ne.s32.totalorder %s299, %s300
    %p311 = scmp.eq.s32.totalorder %s29, 0
    %p312 = por %p310, %p311
    %p313 = scmp.ne.s32.totalorder %s299, %s300
    %p314 = scmp.eq.s32.totalorder %s30, 3
    %p315 = por %p313, %p314
    %p317 = scmp.ne.s32.totalorder %s300, %s316
    %p318 = scmp.eq.s32.totalorder %s30, 0
    %p319 = por %p317, %p318
    %s320 = ssub.s32 %s32, %s39
    %p321 = scmp.eq.s32.totalorder %s320, 0
    %s323 = sadd.s32 %s322, 1
    %s324 = scalar_select %p321, %s322, %s323
    %p327 = pneg %p321
    %p328 = scmp.eq.s32.totalorder %s24, 3
    %p329 = por %p327, %p328
    %p330 = scmp.ne.s32.totalorder %s322, %s325
    %p331 = scmp.eq.s32.totalorder %s24, 0
    %p332 = por %p330, %p331
    %p333 = scmp.ne.s32.totalorder %s322, %s325
    %p334 = scmp.eq.s32.totalorder %s29, 3
    %p335 = por %p333, %p334
    %p336 = scmp.ne.s32.totalorder %s325, %s326
    %p337 = scmp.eq.s32.totalorder %s29, 0
    %p338 = por %p336, %p337
    %p339 = scmp.ne.s32.totalorder %s325, %s326
    %p340 = scmp.eq.s32.totalorder %s30, 3
    %p341 = por %p339, %p340
    %p343 = scmp.ne.s32.totalorder %s326, %s342
    %p344 = scmp.eq.s32.totalorder %s30, 0
    %p345 = por %p343, %p344
    %s346 = ssub.s32 %s32, %s39
    %p347 = scmp.eq.s32.totalorder %s346, 0
    %s349 = sadd.s32 %s348, 1
    %s350 = scalar_select %p347, %s348, %s349
    %p353 = pneg %p347
    %p354 = scmp.eq.s32.totalorder %s24, 3
    %p355 = por %p353, %p354
    %p356 = scmp.ne.s32.totalorder %s348, %s351
    %p357 = scmp.eq.s32.totalorder %s24, 0
    %p358 = por %p356, %p357
    %p359 = scmp.ne.s32.totalorder %s348, %s351
    %p360 = scmp.eq.s32.totalorder %s29, 3
    %p361 = por %p359, %p360
    %p362 = scmp.ne.s32.totalorder %s351, %s352
    %p363 = scmp.eq.s32.totalorder %s29, 0
    %p364 = por %p362, %p363
    %p365 = scmp.ne.s32.totalorder %s351, %s352
    %p366 = scmp.eq.s32.totalorder %s30, 3
    %p367 = por %p365, %p366
    %p369 = scmp.ne.s32.totalorder %s352, %s368
    %p370 = scmp.eq.s32.totalorder %s30, 0
    %p371 = por %p369, %p370
    %s372 = ssub.s32 %s32, %s39
    %p373 = scmp.eq.s32.totalorder %s372, 0
    %s375 = sadd.s32 %s374, 1
    %s376 = scalar_select %p373, %s374, %s375
    %p379 = pneg %p373
    %p380 = scmp.eq.s32.totalorder %s24, 3
    %p381 = por %p379, %p380
    %p382 = scmp.ne.s32.totalorder %s374, %s377
    %p383 = scmp.eq.s32.totalorder %s24, 0
    %p384 = por %p382, %p383
    %p385 = scmp.ne.s32.totalorder %s374, %s377
    %p386 = scmp.eq.s32.totalorder %s29, 3
    %p387 = por %p385, %p386
    %p388 = scmp.ne.s32.totalorder %s377, %s378
    %p389 = scmp.eq.s32.totalorder %s29, 0
    %p390 = por %p388, %p389
    %p391 = scmp.ne.s32.totalorder %s377, %s378
    %p392 = scmp.eq.s32.totalorder %s30, 3
    %p393 = por %p391, %p392
    %p395 = scmp.ne.s32.totalorder %s378, %s394
    %p396 = scmp.eq.s32.totalorder %s30, 0
    %p397 = por %p395, %p396
    %s398 = ssub.s32 %s32, %s39
    %p399 = scmp.eq.s32.totalorder %s398, 0
    %s401 = sadd.s32 %s400, 1
    %s402 = scalar_select %p399, %s400, %s401
    %p405 = pneg %p399
    %p406 = scmp.eq.s32.totalorder %s24, 3
    %p407 = por %p405, %p406
    %p408 = scmp.ne.s32.totalorder %s400, %s403
    %p409 = scmp.eq.s32.totalorder %s24, 0
    %p410 = por %p408, %p409
    %p411 = scmp.ne.s32.totalorder %s400, %s403
    %p412 = scmp.eq.s32.totalorder %s29, 3
    %p413 = por %p411, %p412
    %p414 = scmp.ne.s32.totalorder %s403, %s404
    %p415 = scmp.eq.s32.totalorder %s29, 0
    %p416 = por %p414, %p415
    %p417 = scmp.ne.s32.totalorder %s403, %s404
    %p418 = scmp.eq.s32.totalorder %s30, 3
    %p419 = por %p417, %p418
    %p421 = scmp.ne.s32.totalorder %s404, %s420
    %p422 = scmp.eq.s32.totalorder %s30, 0
    %p423 = por %p421, %p422
    %s424 = ssub.s32 %s32, %s39
    %p425 = scmp.eq.s32.totalorder %s424, 0
    %s427 = sadd.s32 %s426, 1
    %s428 = scalar_select %p425, %s426, %s427
    %p431 = pneg %p425
    %p432 = scmp.eq.s32.totalorder %s24, 3
    %p433 = por %p431, %p432
    %p434 = scmp.ne.s32.totalorder %s426, %s429
    %p435 = scmp.eq.s32.totalorder %s24, 0
    %p436 = por %p434, %p435
    %p437 = scmp.ne.s32.totalorder %s426, %s429
    %p438 = scmp.eq.s32.totalorder %s29, 3
    %p439 = por %p437, %p438
    %p440 = scmp.ne.s32.totalorder %s429, %s430
    %p441 = scmp.eq.s32.totalorder %s29, 0
    %p442 = por %p440, %p441
    %p443 = scmp.ne.s32.totalorder %s429, %s430
    %p444 = scmp.eq.s32.totalorder %s30, 3
    %p445 = por %p443, %p444
    %p447 = scmp.ne.s32.totalorder %s430, %s446
    %p448 = scmp.eq.s32.totalorder %s30, 0
    %p449 = por %p447, %p448
    %s451 = sadd.s32 %s450, 1
    %p454 = scmp.eq.s32.totalorder %s24, 3
    %p455 = scmp.ne.s32.totalorder %s450, %s452
    %p456 = scmp.eq.s32.totalorder %s24, 0
    %p457 = por %p455, %p456
    %p458 = scmp.ne.s32.totalorder %s450, %s452
    %p459 = scmp.eq.s32.totalorder %s29, 3
    %p460 = por %p458, %p459
    %p461 = scmp.ne.s32.totalorder %s452, %s453
    %p462 = scmp.eq.s32.totalorder %s29, 0
    %p463 = por %p461, %p462
    %p464 = scmp.ne.s32.totalorder %s452, %s453
    %p465 = scmp.eq.s32.totalorder %s30, 3
    %p466 = por %p464, %p465
    %p468 = scmp.ne.s32.totalorder %s453, %s467
    %p469 = scmp.eq.s32.totalorder %s30, 0
    %p470 = por %p468, %p469
    %s472 = sadd.s32 %s471, 1
    %p475 = scmp.eq.s32.totalorder %s24, 3
    %p476 = scmp.ne.s32.totalorder %s471, %s473
    %p477 = scmp.eq.s32.totalorder %s24, 0
    %p478 = por %p476, %p477
    %p479 = scmp.ne.s32.totalorder %s471, %s473
    %p480 = scmp.eq.s32.totalorder %s29, 3
    %p481 = por %p479, %p480
    %p482 = scmp.ne.s32.totalorder %s473, %s474
    %p483 = scmp.eq.s32.totalorder %s29, 0
    %p484 = por %p482, %p483
    %p485 = scmp.ne.s32.totalorder %s473, %s474
    %p486 = scmp.eq.s32.totalorder %s30, 3
    %p487 = por %p485, %p486
    %p489 = scmp.ne.s32.totalorder %s474, %s488
    %p490 = scmp.eq.s32.totalorder %s30, 0
    %p491 = por %p489, %p490
    %s492 = ssub.s32 %s31, %s43
    %p493 = scmp.eq.s32.totalorder %s492, 0
    %s495 = sadd.s32 %s494, 1
    %s496 = scalar_select %p493, %s494, %s495
    %p499 = pneg %p493
    %p500 = scmp.eq.s32.totalorder %s24, 3
    %p501 = por %p499, %p500
    %p502 = scmp.ne.s32.totalorder %s494, %s497
    %p503 = scmp.eq.s32.totalorder %s24, 0
    %p504 = por %p502, %p503
    %p505 = scmp.ne.s32.totalorder %s494, %s497
    %p506 = scmp.eq.s32.totalorder %s29, 3
    %p507 = por %p505, %p506
    %p508 = scmp.ne.s32.totalorder %s497, %s498
    %p509 = scmp.eq.s32.totalorder %s29, 0
    %p510 = por %p508, %p509
    %p511 = scmp.ne.s32.totalorder %s497, %s498
    %p512 = scmp.eq.s32.totalorder %s30, 3
    %p513 = por %p511, %p512
    %p515 = scmp.ne.s32.totalorder %s498, %s514
    %p516 = scmp.eq.s32.totalorder %s30, 0
    %p517 = por %p515, %p516
    %p518 = scmp.le.s32.totalorder 1, %s24
    %p519 = scmp.lt.s32.totalorder %s24, 5
    %p520 = pnand %p518, %p519
    %p521 = pneg %p520
    // Predicated region
    $region9: #{specter2_forward.1} parent=5 // pred_check
      _
    $region10: #{specter2_forward.1} parent=5 // pred_check_branch
      %523 = sbr.rel (%p520) target = $region12
    $region11: #{specter2_forward.1} parent=5 // pred_region
      %s524 = ssub.s32 %s24, 1
      // Predicated region
      $region13: #{specter2_forward.1} parent=11 // pred_check
        %p525 = pneg %p109
      $region14: #{specter2_forward.1} parent=11 // pred_check_branch
        %527 = sbr.rel (%p525) target = $region16
      $region15: #{specter2_forward.1} parent=11 // pred_region
        _
      $region16: #{specter2_forward.1} parent=11 // pred_fallthru
        _
      // Predicated region
      $region17: #{specter2_forward.1} parent=11 // pred_check
        %p528 = pneg %p130
      $region18: #{specter2_forward.1} parent=11 // pred_check_branch
        %530 = sbr.rel (%p528) target = $region20
      $region19: #{specter2_forward.1} parent=11 // pred_region
        _
      $region20: #{specter2_forward.1} parent=11 // pred_fallthru
        _
      // Predicated region
      $region21: #{specter2_forward.1} parent=11 // pred_check
        %p531 = pneg %p463
      $region22: #{specter2_forward.1} parent=11 // pred_check_branch
        %533 = sbr.rel (%p531) target = $region24
      $region23: #{specter2_forward.1} parent=11 // pred_region
        _
      $region24: #{specter2_forward.1} parent=11 // pred_fallthru
        _
      // Predicated region
      $region25: #{specter2_forward.1} parent=11 // pred_check
        %p534 = pneg %p484
      $region26: #{specter2_forward.1} parent=11 // pred_check_branch
        %536 = sbr.rel (%p534) target = $region28
      $region27: #{specter2_forward.1} parent=11 // pred_region
        _
      $region28: #{specter2_forward.1} parent=11 // pred_fallthru
        _
    $region12: #{specter2_forward.1} parent=5 // pred_fallthru
      _
    %p537 = scmp.lt.s32.totalorder %s24, 4
    // Predicated region
    $region29: #{specter2_forward.1} parent=5 // pred_check
      %p538 = pneg %p537
    $region30: #{specter2_forward.1} parent=5 // pred_check_branch
      %540 = sbr.rel (%p538) target = $region32
    $region31: #{specter2_forward.1} parent=5 // pred_region
      // Predicated region
      $region33: #{specter2_forward.1} parent=31 // pred_check
        %p541 = pneg %p56
      $region34: #{specter2_forward.1} parent=31 // pred_check_branch
        %543 = sbr.rel (%p541) target = $region36
      $region35: #{specter2_forward.1} parent=31 // pred_region
        %p544 = scmp.lt.s32.totalorder %s31, 1
        %s545 = scalar_select %p544, %s31, 1
        %s546 = smul.addr %s545, 8
        %s547 = scalar_lea.vmem %s0, %s546
      $region36: #{specter2_forward.1} parent=31 // pred_fallthru
        _
      // Predicated region
      $region37: #{specter2_forward.1} parent=31 // pred_check
        %p548 = pneg %p82
      $region38: #{specter2_forward.1} parent=31 // pred_check_branch
        %550 = sbr.rel (%p548) target = $region40
      $region39: #{specter2_forward.1} parent=31 // pred_region
        %p551 = scmp.lt.s32.totalorder %s31, 1
        %s552 = scalar_select %p551, %s31, 1
        %s553 = scalar_lea.vmem %s1, %s552
      $region40: #{specter2_forward.1} parent=31 // pred_fallthru
        _
      // Predicated region
      $region41: #{specter2_forward.1} parent=31 // pred_check
        %p554 = pneg %p150
      $region42: #{specter2_forward.1} parent=31 // pred_check_branch
        %556 = sbr.rel (%p554) target = $region44
      $region43: #{specter2_forward.1} parent=31 // pred_region
        %p557 = scmp.lt.s32.totalorder %s32, 1
        %s558 = scalar_select %p557, %s32, 1
        %s559 = smul.addr %s558, 4
        %s560 = smul.addr %s559, 4
        %s561 = scalar_lea.vmem %s4, %s560
      $region44: #{specter2_forward.1} parent=31 // pred_fallthru
        _
      // Predicated region
      $region45: #{specter2_forward.1} parent=31 // pred_check
        %p562 = pneg %p176
      $region46: #{specter2_forward.1} parent=31 // pred_check_branch
        %564 = sbr.rel (%p562) target = $region48
      $region47: #{specter2_forward.1} parent=31 // pred_region
        %p565 = scmp.lt.s32.totalorder %s32, 1
        %s566 = scalar_select %p565, %s32, 1
        %s567 = scalar_lea.vmem %s5, %s566
      $region48: #{specter2_forward.1} parent=31 // pred_fallthru
        _
      // Predicated region
      $region49: #{specter2_forward.1} parent=31 // pred_check
        %p568 = pneg %p202
      $region50: #{specter2_forward.1} parent=31 // pred_check_branch
        %570 = sbr.rel (%p568) target = $region52
      $region51: #{specter2_forward.1} parent=31 // pred_region
        %p571 = scmp.lt.s32.totalorder %s32, 1
        %s572 = scalar_select %p571, %s32, 1
        %s573 = smul.addr %s572, 4
        %s574 = smul.addr %s573, 4
        %s575 = scalar_lea.vmem %s6, %s574
      $region52: #{specter2_forward.1} parent=31 // pred_fallthru
        _
      // Predicated region
      $region53: #{specter2_forward.1} parent=31 // pred_check
        %p576 = pneg %p228
      $region54: #{specter2_forward.1} parent=31 // pred_check_branch
        %578 = sbr.rel (%p576) target = $region56
      $region55: #{specter2_forward.1} parent=31 // pred_region
        %p579 = scmp.lt.s32.totalorder %s32, 1
        %s580 = scalar_select %p579, %s32, 1
        %s581 = scalar_lea.vmem %s7, %s580
      $region56: #{specter2_forward.1} parent=31 // pred_fallthru
        _
      // Predicated region
      $region57: #{specter2_forward.1} parent=31 // pred_check
        %p582 = pneg %p254
      $region58: #{specter2_forward.1} parent=31 // pred_check_branch
        %584 = sbr.rel (%p582) target = $region60
      $region59: #{specter2_forward.1} parent=31 // pred_region
        %p585 = scmp.lt.s32.totalorder %s32, 1
        %s586 = scalar_select %p585, %s32, 1
        %s587 = scalar_lea.vmem %s8, %s586
      $region60: #{specter2_forward.1} parent=31 // pred_fallthru
        _
      // Predicated region
      $region61: #{specter2_forward.1} parent=31 // pred_check
        %p588 = pneg %p280
      $region62: #{specter2_forward.1} parent=31 // pred_check_branch
        %590 = sbr.rel (%p588) target = $region64
      $region63: #{specter2_forward.1} parent=31 // pred_region
        %p591 = scmp.lt.s32.totalorder %s32, 1
        %s592 = scalar_select %p591, %s32, 1
        %s593 = scalar_lea.vmem %s9, %s592
      $region64: #{specter2_forward.1} parent=31 // pred_fallthru
        _
      // Predicated region
      $region65: #{specter2_forward.1} parent=31 // pred_check
        %p594 = pneg %p306
      $region66: #{specter2_forward.1} parent=31 // pred_check_branch
        %596 = sbr.rel (%p594) target = $region68
      $region67: #{specter2_forward.1} parent=31 // pred_region
        %p597 = scmp.lt.s32.totalorder %s32, 1
        %s598 = scalar_select %p597, %s32, 1
        %s599 = smul.addr %s598, 4
        %s600 = smul.addr %s599, 4
        %s601 = scalar_lea.vmem %s10, %s600
      $region68: #{specter2_forward.1} parent=31 // pred_fallthru
        _
      // Predicated region
      $region69: #{specter2_forward.1} parent=31 // pred_check
        %p602 = pneg %p332
      $region70: #{specter2_forward.1} parent=31 // pred_check_branch
        %604 = sbr.rel (%p602) target = $region72
      $region71: #{specter2_forward.1} parent=31 // pred_region
        %p605 = scmp.lt.s32.totalorder %s32, 1
        %s606 = scalar_select %p605, %s32, 1
        %s607 = scalar_lea.vmem %s11, %s606
      $region72: #{specter2_forward.1} parent=31 // pred_fallthru
        _
      // Predicated region
      $region73: #{specter2_forward.1} parent=31 // pred_check
        %p608 = pneg %p358
      $region74: #{specter2_forward.1} parent=31 // pred_check_branch
        %610 = sbr.rel (%p608) target = $region76
      $region75: #{specter2_forward.1} parent=31 // pred_region
        %p611 = scmp.lt.s32.totalorder %s32, 1
        %s612 = scalar_select %p611, %s32, 1
        %s613 = smul.addr %s612, 8
        %s614 = smul.addr %s613, 4
        %s615 = scalar_lea.vmem %s12, %s614
      $region76: #{specter2_forward.1} parent=31 // pred_fallthru
        _
      // Predicated region
      $region77: #{specter2_forward.1} parent=31 // pred_check
        %p616 = pneg %p384
      $region78: #{specter2_forward.1} parent=31 // pred_check_branch
        %618 = sbr.rel (%p616) target = $region80
      $region79: #{specter2_forward.1} parent=31 // pred_region
        %p619 = scmp.lt.s32.totalorder %s32, 1
        %s620 = scalar_select %p619, %s32, 1
        %s621 = scalar_lea.vmem %s13, %s620
      $region80: #{specter2_forward.1} parent=31 // pred_fallthru
        _
      // Predicated region
      $region81: #{specter2_forward.1} parent=31 // pred_check
        %p622 = pneg %p410
      $region82: #{specter2_forward.1} parent=31 // pred_check_branch
        %624 = sbr.rel (%p622) target = $region84
      $region83: #{specter2_forward.1} parent=31 // pred_region
        %p625 = scmp.lt.s32.totalorder %s32, 1
        %s626 = scalar_select %p625, %s32, 1
        %s627 = scalar_lea.vmem %s14, %s626
      $region84: #{specter2_forward.1} parent=31 // pred_fallthru
        _
      // Predicated region
      $region85: #{specter2_forward.1} parent=31 // pred_check
        %p628 = pneg %p436
      $region86: #{specter2_forward.1} parent=31 // pred_check_branch
        %630 = sbr.rel (%p628) target = $region88
      $region87: #{specter2_forward.1} parent=31 // pred_region
        %p631 = scmp.lt.s32.totalorder %s32, 1
        %s632 = scalar_select %p631, %s32, 1
        %s633 = scalar_lea.vmem %s15, %s632
      $region88: #{specter2_forward.1} parent=31 // pred_fallthru
        _
    $region32: #{specter2_forward.1} parent=5 // pred_fallthru
      _
    %p634 = scmp.le.s32.totalorder 1, %s24
    %p635 = scmp.lt.s32.totalorder %s24, 5
    %p636 = pnand %p634, %p635
    %p637 = pneg %p636
    // Predicated region
    $region89: #{specter2_forward.1} parent=5 // pred_check
      _
    $region90: #{specter2_forward.1} parent=5 // pred_check_branch
      %639 = sbr.rel (%p636) target = $region92
    $region91: #{specter2_forward.1} parent=5 // pred_region
      %s640 = ssub.s32 %s24, 1
      %p641 = scmp.lt.s32.totalorder %s33, 1
      %s642 = scalar_select %p641, %s33, 1
      %s643 = smul.addr %s642, 8
      %s644 = scalar_lea.vmem %s0, %s643
      %p645 = pneg %p62
      %p646 = pneg %p59
      %p647 = scmp.lt.s32.totalorder %s33, 1
      %s648 = scalar_select %p647, %s33, 1
      %s649 = scalar_lea.vmem %s1, %s648
      %p650 = pneg %p88
      %p651 = pneg %p85
      %p652 = pneg %p109
      %p653 = pneg %p106
      %p654 = pneg %p130
      %p655 = pneg %p127
      %p656 = scmp.lt.s32.totalorder %s34, 1
      %s657 = scalar_select %p656, %s34, 1
      %s658 = smul.addr %s657, 4
      %s659 = smul.addr %s658, 4
      %s660 = scalar_lea.vmem %s4, %s659
      %p661 = pneg %p156
      %p662 = pneg %p153
      %p663 = scmp.lt.s32.totalorder %s34, 1
      %s664 = scalar_select %p663, %s34, 1
      %s665 = scalar_lea.vmem %s5, %s664
      %p666 = pneg %p182
      %p667 = pneg %p179
      %p668 = scmp.lt.s32.totalorder %s34, 1
      %s669 = scalar_select %p668, %s34, 1
      %s670 = smul.addr %s669, 4
      %s671 = smul.addr %s670, 4
      %s672 = scalar_lea.vmem %s6, %s671
      %p673 = pneg %p208
      %p674 = pneg %p205
      %p675 = scmp.lt.s32.totalorder %s34, 1
      %s676 = scalar_select %p675, %s34, 1
      %s677 = scalar_lea.vmem %s7, %s676
      %p678 = pneg %p234
      %p679 = pneg %p231
      %p680 = scmp.lt.s32.totalorder %s34, 1
      %s681 = scalar_select %p680, %s34, 1
      %s682 = scalar_lea.vmem %s8, %s681
      %p683 = pneg %p260
      %p684 = pneg %p257
      %p685 = scmp.lt.s32.totalorder %s34, 1
      %s686 = scalar_select %p685, %s34, 1
      %s687 = scalar_lea.vmem %s9, %s686
      %p688 = pneg %p286
      %p689 = pneg %p283
      %p690 = scmp.lt.s32.totalorder %s34, 1
      %s691 = scalar_select %p690, %s34, 1
      %s692 = smul.addr %s691, 4
      %s693 = smul.addr %s692, 4
      %s694 = scalar_lea.vmem %s10, %s693
      %p695 = pneg %p312
      %p696 = pneg %p309
      %p697 = scmp.lt.s32.totalorder %s34, 1
      %s698 = scalar_select %p697, %s34, 1
      %s699 = scalar_lea.vmem %s11, %s698
      %p700 = pneg %p338
      %p701 = pneg %p335
      %p702 = scmp.lt.s32.totalorder %s34, 1
      %s703 = scalar_select %p702, %s34, 1
      %s704 = smul.addr %s703, 8
      %s705 = smul.addr %s704, 4
      %s706 = scalar_lea.vmem %s12, %s705
      %p707 = pneg %p364
      %p708 = pneg %p361
      %p709 = scmp.lt.s32.totalorder %s34, 1
      %s710 = scalar_select %p709, %s34, 1
      %s711 = scalar_lea.vmem %s13, %s710
      %p712 = pneg %p390
      %p713 = pneg %p387
      %p714 = scmp.lt.s32.totalorder %s34, 1
      %s715 = scalar_select %p714, %s34, 1
      %s716 = scalar_lea.vmem %s14, %s715
      %p717 = pneg %p416
      %p718 = pneg %p413
      %p719 = scmp.lt.s32.totalorder %s34, 1
      %s720 = scalar_select %p719, %s34, 1
      %s721 = scalar_lea.vmem %s15, %s720
      %p722 = pneg %p442
      %p723 = pneg %p439
      %p724 = pneg %p463
      %p725 = pneg %p460
      %p726 = pneg %p484
      %p727 = pneg %p481
      %p728 = pneg %p510
      %p729 = pneg %p507
      %p730 = scmp.lt.s32.totalorder %s33, 1
      %s731 = scalar_select %p730, %s33, 1
      %s732 = smul.addr %s731, 8
      %s733 = scalar_lea.vmem %s18, %s732
      %p734 = scmp.lt.s32.totalorder %s33, 1
      %s735 = scalar_select %p734, %s33, 1
      %s736 = smul.addr %s735, 8
      %s737 = scalar_lea.vmem %s0, %s736
      %p738 = scmp.lt.s32.totalorder %s33, 1
      %s739 = scalar_select %p738, %s33, 1
      %s740 = scalar_lea.vmem %s1, %s739
      %p741 = scmp.lt.s32.totalorder %s34, 1
      %s742 = scalar_select %p741, %s34, 1
      %s743 = smul.addr %s742, 4
      %s744 = smul.addr %s743, 4
      %s745 = scalar_lea.vmem %s4, %s744
      %p746 = scmp.lt.s32.totalorder %s34, 1
      %s747 = scalar_select %p746, %s34, 1
      %s748 = scalar_lea.vmem %s5, %s747
      %p749 = scmp.lt.s32.totalorder %s34, 1
      %s750 = scalar_select %p749, %s34, 1
      %s751 = smul.addr %s750, 4
      %s752 = smul.addr %s751, 4
      %s753 = scalar_lea.vmem %s6, %s752
      %p754 = scmp.lt.s32.totalorder %s34, 1
      %s755 = scalar_select %p754, %s34, 1
      %s756 = scalar_lea.vmem %s7, %s755
      %p757 = scmp.lt.s32.totalorder %s34, 1
      %s758 = scalar_select %p757, %s34, 1
      %s759 = scalar_lea.vmem %s8, %s758
      %p760 = scmp.lt.s32.totalorder %s34, 1
      %s761 = scalar_select %p760, %s34, 1
      %s762 = scalar_lea.vmem %s9, %s761
      %p763 = scmp.lt.s32.totalorder %s34, 1
      %s764 = scalar_select %p763, %s34, 1
      %s765 = smul.addr %s764, 4
      %s766 = smul.addr %s765, 4
      %s767 = scalar_lea.vmem %s10, %s766
      %p768 = scmp.lt.s32.totalorder %s34, 1
      %s769 = scalar_select %p768, %s34, 1
      %s770 = scalar_lea.vmem %s11, %s769
      %p771 = scmp.lt.s32.totalorder %s34, 1
      %s772 = scalar_select %p771, %s34, 1
      %s773 = smul.addr %s772, 8
      %s774 = smul.addr %s773, 4
      %s775 = scalar_lea.vmem %s12, %s774
      %p776 = scmp.lt.s32.totalorder %s34, 1
      %s777 = scalar_select %p776, %s34, 1
      %s778 = scalar_lea.vmem %s13, %s777
      %p779 = scmp.lt.s32.totalorder %s34, 1
      %s780 = scalar_select %p779, %s34, 1
      %s781 = scalar_lea.vmem %s14, %s780
      %p782 = scmp.lt.s32.totalorder %s34, 1
      %s783 = scalar_select %p782, %s34, 1
      %s784 = scalar_lea.vmem %s15, %s783
      %p785 = scmp.lt.s32.totalorder %s33, 1
      %s786 = scalar_select %p785, %s33, 1
      %s787 = smul.addr %s786, 8
      %s788 = scalar_lea.vmem %s18, %s787
      %p790 = scmp.eq.s32.totalorder %s34, 0
      // Predicated region
      $region93: #{specter2_forward.1} parent=91 // pred_check
        %p791 = pneg %p790
      $region94: #{specter2_forward.1} parent=91 // pred_check_branch
        %793 = sbr.rel (%p791) target = $region96
      $region95: #{specter2_forward.1} parent=91 // pred_region
        %v794 = vld [vmem:[%s737] sm:$0xff]
        %v795 = vld [vmem:[%s2] sm:$0x1]
        %v796 = vld [vmem:[%s3] sm:$0x1]
        %vm797 = vcmask 261120
        %v798 = vsel %vm797, %v794, 0.0
        %799 = vadd.xlane.f32.xlu0 %v798
        %v800 = vpop.xlane.xlu0 %799
        %v801 = vrcp.pop 32.0
        %v802 = vmul.f32 %v800, %v801
        %v803 = vsub.f32 %v794, %v802
        %v804 = vmul.f32 %v803, %v803
        %v805 = vsel %vm797, %v804, 0.0
        %806 = vadd.xlane.f32.xlu0 %v805
        %v807 = vpop.xlane.xlu0 %806
        %v808 = vmul.f32 %v807, %v801
        %v809 = vadd.f32 %v808, 1e-12
        %v810 = vrsqrt.pop %v809
        %v811 = vmul.f32 %v803, %v810
        %v813 = vlaneseq
        %v814 = vshrl.u32 %v813, 7
        %v815 = vsub.s32 0, %v814
        %v816 = vrot.slane %v795, %v815
        %v818 = vmul.f32 %v811, %v816
        %v820 = vlaneseq
        %v821 = vshrl.u32 %v820, 7
        %v822 = vsub.s32 0, %v821
        %v823 = vrot.slane %v796, %v822
        %v825 = vadd.f32 %v818, %v823
        %826 = vst.msk [vmem:[#allocation2] sm:$0xff] %vm797, %v825
      $region96: #{specter2_forward.1} parent=91 // pred_fallthru
        _
      %v827 = vld [vmem:[#allocation2] sm:$0xff]
      %v828 = vpack.c.bf16 %v827, %v827
      %v829 = vld [vmem:[%s740] sm:$0x1]
      %v830 = vld [vmem:[%s745] sm:$0xf]
      %v831 = vld [vmem:[%s745 + $0x4] sm:$0xf]
      %v832 = vld [vmem:[%s745 + $0x8] sm:$0xf]
      %v833 = vld [vmem:[%s745 + $0xc] sm:$0xf]
      %v834 = vld [vmem:[%s748] sm:$0x1]
      %v836 = vlaneseq
      %v837 = vshrl.u32 %v836, 7
      %v838 = vsub.s32 0, %v837
      %v839 = vrot.slane %v834, %v838
      %v845 = vunpack.c.l.b16 %v830
      %v846 = vunpack.c.l.b16 %v831
      %v847 = vunpack.c.l.b16 %v832
      %v848 = vunpack.c.l.b16 %v833
      %v849 = vpack.c.b16 %v846, %v845
      %v850 = vpack.c.b16 %v848, %v847
      %vm853 = vcmask 261120
      %v855 = vsel %vm853, %v828, 0
      %857 = vmatprep.subr.bf16.mxu0 0
      %858 = vmatpush1.bf16.msra.mxu0 %v849
      %859 = vmatprep.subr.bf16.mxu0 0
      %860 = vmatpush1.bf16.msra.mxu0 %v850
      %861 = vmatprep.subr.bf16.mxu0 0
      %862 = vmatpush1.bf16.msra.mxu0 0
      %863 = vmatprep.subr.bf16.mxu0 0
      %864 = vmatpush1.bf16.msra.mxu0 0
      %865 = vmatprep.subr.bf16.mxu0 0
      %866 = vmatpush1.bf16.msra.mxu0 0
      %867 = vmatprep.subr.bf16.mxu0 0
      %868 = vmatpush1.bf16.msra.mxu0 0
      %869 = vmatprep.subr.bf16.mxu0 0
      %870 = vmatpush1.bf16.msra.mxu0 0
      %871 = vmatprep.subr.bf16.mxu0 0
      %872 = vmatpush1.bf16.msra.mxu0 0
      %873 = vmatprep.subr.bf16.mxu0 0
      %874 = vmatpush1.bf16.msra.mxu0 0
      %875 = vmatprep.subr.bf16.mxu0 0
      %876 = vmatpush1.bf16.msra.mxu0 0
      %877 = vmatprep.subr.bf16.mxu0 0
      %878 = vmatpush1.bf16.msra.mxu0 0
      %879 = vmatprep.subr.bf16.mxu0 0
      %880 = vmatpush1.bf16.msra.mxu0 0
      %881 = vmatprep.subr.bf16.mxu0 0
      %882 = vmatpush1.bf16.msra.mxu0 0
      %883 = vmatprep.subr.bf16.mxu0 0
      %884 = vmatpush1.bf16.msra.mxu0 0
      %885 = vmatprep.subr.bf16.mxu0 0
      %886 = vmatpush1.bf16.msra.mxu0 0
      %887 = vmatprep.subr.bf16.mxu0 0
      %888 = vmatpush1.bf16.msra.mxu0 0
      %889 = vmatprep.mubr.bf16.mxu0 0
      %890 = vmatmul.mubr.bf16.gmra.mrb[0].mxu0 %v855
      %v891 = vpop.f32.mrb[0].mxu0
      %v892 = vadd.f32 %v839, %v891
      %v893 = vpop.f32.mrb[0].mxu0
      %v894 = vpop.f32.mrb[0].mxu0
      %v895 = vpop.f32.mrb[0].mxu0
      %896 = vdwg.mxu0
      %v897 = vpack.c.bf16 %v892, %v892
      %v899 = vlaneseq
      %v900 = vshrl.u32 %v899, 7
      %v901 = vsub.s32 0, %v900
      %v902 = vrot.slane %v829, %v901
      %905 = vrot.lane.b32.xlu0 %v897, 96
      %v906 = vpop.permute.xlu0 %905
      %vm907 = vcmask 130048
      %v909 = vsel %vm907, %v897, 0
      %v912 = vsel %vm907, %v906, 0
      %914 = vmatprep.subr.bf16.mxu0 0
      %915 = vmatpush1.bf16.xpose.msra.mxu0 %v912
      %916 = vmatprep.subr.bf16.mxu0 0
      %917 = vmatpush1.bf16.xpose.msra.mxu0 0
      %918 = vmatprep.subr.bf16.mxu0 0
      %919 = vmatpush1.bf16.xpose.msra.mxu0 0
      %920 = vmatprep.subr.bf16.mxu0 0
      %921 = vmatpush1.bf16.xpose.msra.mxu0 0
      %922 = vmatprep.subr.bf16.mxu0 0
      %923 = vmatpush1.bf16.xpose.msra.mxu0 0
      %924 = vmatprep.subr.bf16.mxu0 0
      %925 = vmatpush1.bf16.xpose.msra.mxu0 0
      %926 = vmatprep.subr.bf16.mxu0 0
      %927 = vmatpush1.bf16.xpose.msra.mxu0 0
      %928 = vmatprep.subr.bf16.mxu0 0
      %929 = vmatpush1.bf16.xpose.msra.mxu0 0
      %930 = vmatprep.subr.bf16.mxu0 0
      %931 = vmatpush1.bf16.xpose.msra.mxu0 0
      %932 = vmatprep.subr.bf16.mxu0 0
      %933 = vmatpush1.bf16.xpose.msra.mxu0 0
      %934 = vmatprep.subr.bf16.mxu0 0
      %935 = vmatpush1.bf16.xpose.msra.mxu0 0
      %936 = vmatprep.subr.bf16.mxu0 0
      %937 = vmatpush1.bf16.xpose.msra.mxu0 0
      %938 = vmatprep.subr.bf16.mxu0 0
      %939 = vmatpush1.bf16.xpose.msra.mxu0 0
      %940 = vmatprep.subr.bf16.mxu0 0
      %941 = vmatpush1.bf16.xpose.msra.mxu0 0
      %942 = vmatprep.subr.bf16.mxu0 0
      %943 = vmatpush1.bf16.xpose.msra.mxu0 0
      %944 = vmatprep.subr.bf16.mxu0 0
      %945 = vmatpush1.bf16.xpose.msra.mxu0 0
      %946 = vmatprep.mubr.bf16.mxu0 0
      %947 = vmatmul.mubr.bf16.gmra.mrb[0].mxu0 %v909
      %v948 = vpop.f32.mrb[0].mxu0
      %v949 = vadd.f32 %v902, %v948
      %v950 = vpop.f32.mrb[0].mxu0
      %v951 = vpop.f32.mrb[0].mxu0
      %v952 = vpop.f32.mrb[0].mxu0
      %953 = vdwg.mxu0
      %vm954 = vcmask 64512
      %v955 = vsel %vm954, %v949, -inf
      %956 = vmax.xlane.f32.xlu0 %v955
      %v957 = vpop.xlane.xlu0 %956
      %v958 = vsub.f32 %v949, %v957
      %v959 = vmul.f32 %v958, 1.442695
      %v960 = vpow.pop %v959
      %v961 = vsel %vm954, %v960, 0.0
      %962 = vadd.xlane.f32.xlu0 %v961
      %v963 = vpop.xlane.xlu0 %962
      %v964 = vrcp.pop %v963
      %v965 = vmul.f32 %v960, %v964
      %v966 = vpack.c.bf16 %v965, %v965
      %967 = vrot.lane.b32.xlu0 %v897, 64
      %v968 = vpop.permute.xlu0 %967
      %v970 = vsel %vm954, %v966, 0
      %vm972 = vcmask 1043456
      %v974 = vsel %vm972, %v968, 0
      %976 = vmatprep.subr.bf16.mxu0 0
      %977 = vmatpush1.bf16.msra.mxu0 %v974
      %978 = vmatprep.subr.bf16.mxu0 0
      %979 = vmatpush1.bf16.msra.mxu0 0
      %980 = vmatprep.subr.bf16.mxu0 0
      %981 = vmatpush1.bf16.msra.mxu0 0
      %982 = vmatprep.subr.bf16.mxu0 0
      %983 = vmatpush1.bf16.msra.mxu0 0
      %984 = vmatprep.subr.bf16.mxu0 0
      %985 = vmatpush1.bf16.msra.mxu0 0
      %986 = vmatprep.subr.bf16.mxu0 0
      %987 = vmatpush1.bf16.msra.mxu0 0
      %988 = vmatprep.subr.bf16.mxu0 0
      %989 = vmatpush1.bf16.msra.mxu0 0
      %990 = vmatprep.subr.bf16.mxu0 0
      %991 = vmatpush1.bf16.msra.mxu0 0
      %992 = vmatprep.subr.bf16.mxu0 0
      %993 = vmatpush1.bf16.msra.mxu0 0
      %994 = vmatprep.subr.bf16.mxu0 0
      %995 = vmatpush1.bf16.msra.mxu0 0
      %996 = vmatprep.subr.bf16.mxu0 0
      %997 = vmatpush1.bf16.msra.mxu0 0
      %998 = vmatprep.subr.bf16.mxu0 0
      %999 = vmatpush1.bf16.msra.mxu0 0
      %1000 = vmatprep.subr.bf16.mxu0 0
      %1001 = vmatpush1.bf16.msra.mxu0 0
      %1002 = vmatprep.subr.bf16.mxu0 0
      %1003 = vmatpush1.bf16.msra.mxu0 0
      %1004 = vmatprep.subr.bf16.mxu0 0
      %1005 = vmatpush1.bf16.msra.mxu0 0
      %1006 = vmatprep.subr.bf16.mxu0 0
      %1007 = vmatpush1.bf16.msra.mxu0 0
      %1008 = vmatprep.mubr.bf16.mxu0 0
      %1009 = vmatmul.mubr.bf16.gmra.mrb[0].mxu0 %v970
      %v1010 = vpop.f32.mrb[0].mxu0
      %v1011 = vadd.f32 0.0, %v1010
      %v1012 = vpop.f32.mrb[0].mxu0
      %v1013 = vpop.f32.mrb[0].mxu0
      %v1014 = vpop.f32.mrb[0].mxu0
      %1015 = vdwg.mxu0
      %1016 = vrot.lane.b32.xlu0 %v897, 112
      %v1017 = vpop.permute.xlu0 %1016
      %1018 = vrot.lane.b32.xlu0 %v897, 80
      %v1019 = vpop.permute.xlu0 %1018
      %v1021 = vsel %vm907, %v1017, 0
      %v1024 = vsel %vm907, %v1019, 0
      %1026 = vmatprep.subr.bf16.mxu0 0
      %1027 = vmatpush1.bf16.xpose.msra.mxu0 %v1024
      %1028 = vmatprep.subr.bf16.mxu0 0
      %1029 = vmatpush1.bf16.xpose.msra.mxu0 0
      %1030 = vmatprep.subr.bf16.mxu0 0
      %1031 = vmatpush1.bf16.xpose.msra.mxu0 0
      %1032 = vmatprep.subr.bf16.mxu0 0
      %1033 = vmatpush1.bf16.xpose.msra.mxu0 0
      %1034 = vmatprep.subr.bf16.mxu0 0
      %1035 = vmatpush1.bf16.xpose.msra.mxu0 0
      %1036 = vmatprep.subr.bf16.mxu0 0
      %1037 = vmatpush1.bf16.xpose.msra.mxu0 0
      %1038 = vmatprep.subr.bf16.mxu0 0
      %1039 = vmatpush1.bf16.xpose.msra.mxu0 0
      %1040 = vmatprep.subr.bf16.mxu0 0
      %1041 = vmatpush1.bf16.xpose.msra.mxu0 0
      %1042 = vmatprep.subr.bf16.mxu0 0
      %1043 = vmatpush1.bf16.xpose.msra.mxu0 0
      %1044 = vmatprep.subr.bf16.mxu0 0
      %1045 = vmatpush1.bf16.xpose.msra.mxu0 0
      %1046 = vmatprep.subr.bf16.mxu0 0
      %1047 = vmatpush1.bf16.xpose.msra.mxu0 0
      %1048 = vmatprep.subr.bf16.mxu0 0
      %1049 = vmatpush1.bf16.xpose.msra.mxu0 0
      %1050 = vmatprep.subr.bf16.mxu0 0
      %1051 = vmatpush1.bf16.xpose.msra.mxu0 0
      %1052 = vmatprep.subr.bf16.mxu0 0
      %1053 = vmatpush1.bf16.xpose.msra.mxu0 0
      %1054 = vmatprep.subr.bf16.mxu0 0
      %1055 = vmatpush1.bf16.xpose.msra.mxu0 0
      %1056 = vmatprep.subr.bf16.mxu0 0
      %1057 = vmatpush1.bf16.xpose.msra.mxu0 0
      %1058 = vmatprep.mubr.bf16.mxu0 0
      %1059 = vmatmul.mubr.bf16.gmra.mrb[0].mxu0 %v1021
      %v1060 = vpop.f32.mrb[0].mxu0
      %v1061 = vadd.f32 %v902, %v1060
      %v1062 = vpop.f32.mrb[0].mxu0
      %v1063 = vpop.f32.mrb[0].mxu0
      %v1064 = vpop.f32.mrb[0].mxu0
      %1065 = vdwg.mxu0
      %v1066 = vsel %vm954, %v1061, -inf
      %1067 = vmax.xlane.f32.xlu0 %v1066
      %v1068 = vpop.xlane.xlu0 %1067
      %v1069 = vsub.f32 %v1061, %v1068
      %v1070 = vmul.f32 %v1069, 1.442695
      %v1071 = vpow.pop %v1070
      %v1072 = vsel %vm954, %v1071, 0.0
      %1073 = vadd.xlane.f32.xlu0 %v1072
      %v1074 = vpop.xlane.xlu0 %1073
      %v1075 = vrcp.pop %v1074
      %v1076 = vmul.f32 %v1071, %v1075
      %v1077 = vpack.c.bf16 %v1076, %v1076
      %1078 = vrot.lane.b32.xlu0 %v897, 48
      %v1079 = vpop.permute.xlu0 %1078
      %v1081 = vsel %vm954, %v1077, 0
      %v1084 = vsel %vm972, %v1079, 0
      %1086 = vmatprep.subr.bf16.mxu0 0
      %1087 = vmatpush1.bf16.msra.mxu0 %v1084
      %1088 = vmatprep.subr.bf16.mxu0 0
      %1089 = vmatpush1.bf16.msra.mxu0 0
      %1090 = vmatprep.subr.bf16.mxu0 0
      %1091 = vmatpush1.bf16.msra.mxu0 0
      %1092 = vmatprep.subr.bf16.mxu0 0
      %1093 = vmatpush1.bf16.msra.mxu0 0
      %1094 = vmatprep.subr.bf16.mxu0 0
      %1095 = vmatpush1.bf16.msra.mxu0 0
      %1096 = vmatprep.subr.bf16.mxu0 0
      %1097 = vmatpush1.bf16.msra.mxu0 0
      %1098 = vmatprep.subr.bf16.mxu0 0
      %1099 = vmatpush1.bf16.msra.mxu0 0
      %1100 = vmatprep.subr.bf16.mxu0 0
      %1101 = vmatpush1.bf16.msra.mxu0 0
      %1102 = vmatprep.subr.bf16.mxu0 0
      %1103 = vmatpush1.bf16.msra.mxu0 0
      %1104 = vmatprep.subr.bf16.mxu0 0
      %1105 = vmatpush1.bf16.msra.mxu0 0
      %1106 = vmatprep.subr.bf16.mxu0 0
      %1107 = vmatpush1.bf16.msra.mxu0 0
      %1108 = vmatprep.subr.bf16.mxu0 0
      %1109 = vmatpush1.bf16.msra.mxu0 0
      %1110 = vmatprep.subr.bf16.mxu0 0
      %1111 = vmatpush1.bf16.msra.mxu0 0
      %1112 = vmatprep.subr.bf16.mxu0 0
      %1113 = vmatpush1.bf16.msra.mxu0 0
      %1114 = vmatprep.subr.bf16.mxu0 0
      %1115 = vmatpush1.bf16.msra.mxu0 0
      %1116 = vmatprep.subr.bf16.mxu0 0
      %1117 = vmatpush1.bf16.msra.mxu0 0
      %1118 = vmatprep.mubr.bf16.mxu0 0
      %1119 = vmatmul.mubr.bf16.gmra.mrb[0].mxu0 %v1081
      %v1120 = vpop.f32.mrb[0].mxu0
      %v1121 = vadd.f32 0.0, %v1120
      %v1122 = vpop.f32.mrb[0].mxu0
      %v1123 = vpop.f32.mrb[0].mxu0
      %v1124 = vpop.f32.mrb[0].mxu0
      %1125 = vdwg.mxu0
      %1127 = vrot.lane.b32.xlu0 %v1121, 16
      %v1128 = vpop.permute.xlu0 %1127
      %v1130 = vsel %vm907, %v1011, %v1128
      %v1131 = vpack.c.bf16 %v1130, %v1130
      %v1132 = vld [vmem:[%s753] sm:$0xf]
      %v1133 = vld [vmem:[%s753 + $0x4] sm:$0xf]
      %v1134 = vld [vmem:[%s753 + $0x8] sm:$0xf]
      %v1135 = vld [vmem:[%s753 + $0xc] sm:$0xf]
      %v1136 = vld [vmem:[%s756] sm:$0x1]
      %v1138 = vlaneseq
      %v1139 = vshrl.u32 %v1138, 7
      %v1140 = vsub.s32 0, %v1139
      %v1141 = vrot.slane %v1136, %v1140
      %v1147 = vunpack.c.l.b16 %v1132
      %v1148 = vunpack.c.l.b16 %v1133
      %v1149 = vunpack.c.l.b16 %v1134
      %v1150 = vunpack.c.l.b16 %v1135
      %v1151 = vpack.c.b16 %v1148, %v1147
      %v1152 = vpack.c.b16 %v1150, %v1149
      %v1156 = vsel %vm853, %v1131, 0
      %1158 = vmatprep.subr.bf16.mxu0 0
      %1159 = vmatpush1.bf16.msra.mxu0 %v1151
      %1160 = vmatprep.subr.bf16.mxu0 0
      %1161 = vmatpush1.bf16.msra.mxu0 %v1152
      %1162 = vmatprep.subr.bf16.mxu0 0
      %1163 = vmatpush1.bf16.msra.mxu0 0
      %1164 = vmatprep.subr.bf16.mxu0 0
      %1165 = vmatpush1.bf16.msra.mxu0 0
      %1166 = vmatprep.subr.bf16.mxu0 0
      %1167 = vmatpush1.bf16.msra.mxu0 0
      %1168 = vmatprep.subr.bf16.mxu0 0
      %1169 = vmatpush1.bf16.msra.mxu0 0
      %1170 = vmatprep.subr.bf16.mxu0 0
      %1171 = vmatpush1.bf16.msra.mxu0 0
      %1172 = vmatprep.subr.bf16.mxu0 0
      %1173 = vmatpush1.bf16.msra.mxu0 0
      %1174 = vmatprep.subr.bf16.mxu0 0
      %1175 = vmatpush1.bf16.msra.mxu0 0
      %1176 = vmatprep.subr.bf16.mxu0 0
      %1177 = vmatpush1.bf16.msra.mxu0 0
      %1178 = vmatprep.subr.bf16.mxu0 0
      %1179 = vmatpush1.bf16.msra.mxu0 0
      %1180 = vmatprep.subr.bf16.mxu0 0
      %1181 = vmatpush1.bf16.msra.mxu0 0
      %1182 = vmatprep.subr.bf16.mxu0 0
      %1183 = vmatpush1.bf16.msra.mxu0 0
      %1184 = vmatprep.subr.bf16.mxu0 0
      %1185 = vmatpush1.bf16.msra.mxu0 0
      %1186 = vmatprep.subr.bf16.mxu0 0
      %1187 = vmatpush1.bf16.msra.mxu0 0
      %1188 = vmatprep.subr.bf16.mxu0 0
      %1189 = vmatpush1.bf16.msra.mxu0 0
      %1190 = vmatprep.mubr.bf16.mxu0 0
      %1191 = vmatmul.mubr.bf16.gmra.mrb[0].mxu0 %v1156
      %v1192 = vpop.f32.mrb[0].mxu0
      %v1193 = vadd.f32 %v1141, %v1192
      %v1194 = vpop.f32.mrb[0].mxu0
      %v1195 = vpop.f32.mrb[0].mxu0
      %v1196 = vpop.f32.mrb[0].mxu0
      %1197 = vdwg.mxu0
      %v1198 = vadd.f32 %v1193, %v827
      %v1199 = vld [vmem:[%s759] sm:$0x1]
      %v1200 = vld [vmem:[%s762] sm:$0x1]
      %v1201 = vsel %vm853, %v1198, 0.0
      %1202 = vadd.xlane.f32.xlu0 %v1201
      %v1203 = vpop.xlane.xlu0 %1202
      %v1204 = vrcp.pop 32.0
      %v1205 = vmul.f32 %v1203, %v1204
      %v1206 = vsub.f32 %v1198, %v1205
      %v1207 = vmul.f32 %v1206, %v1206
      %v1208 = vsel %vm853, %v1207, 0.0
      %1209 = vadd.xlane.f32.xlu0 %v1208
      %v1210 = vpop.xlane.xlu0 %1209
      %v1211 = vmul.f32 %v1210, %v1204
      %v1212 = vadd.f32 %v1211, 1e-12
      %v1213 = vrsqrt.pop %v1212
      %v1214 = vmul.f32 %v1206, %v1213
      %v1216 = vlaneseq
      %v1217 = vshrl.u32 %v1216, 7
      %v1218 = vsub.s32 0, %v1217
      %v1219 = vrot.slane %v1199, %v1218
      %v1221 = vmul.f32 %v1214, %v1219
      %v1223 = vlaneseq
      %v1224 = vshrl.u32 %v1223, 7
      %v1225 = vsub.s32 0, %v1224
      %v1226 = vrot.slane %v1200, %v1225
      %v1228 = vadd.f32 %v1221, %v1226
      %v1229 = vpack.c.bf16 %v1228, %v1228
      %v1230 = vld [vmem:[%s767] sm:$0xf]
      %v1231 = vld [vmem:[%s767 + $0x4] sm:$0xf]
      %v1232 = vld [vmem:[%s767 + $0x8] sm:$0xf]
      %v1233 = vld [vmem:[%s767 + $0xc] sm:$0xf]
      %v1234 = vld [vmem:[%s770] sm:$0x1]
      %v1236 = vlaneseq
      %v1237 = vshrl.u32 %v1236, 7
      %v1238 = vsub.s32 0, %v1237
      %v1239 = vrot.slane %v1234, %v1238
      %v1245 = vunpack.c.l.b16 %v1230
      %v1246 = vunpack.c.l.b16 %v1231
      %v1247 = vunpack.c.l.b16 %v1232
      %v1248 = vunpack.c.l.b16 %v1233
      %v1249 = vpack.c.b16 %v1246, %v1245
      %v1250 = vpack.c.b16 %v1248, %v1247
      %v1254 = vsel %vm853, %v1229, 0
      %1256 = vmatprep.subr.bf16.mxu0 0
      %1257 = vmatpush1.bf16.msra.mxu0 %v1249
      %1258 = vmatprep.subr.bf16.mxu0 0
      %1259 = vmatpush1.bf16.msra.mxu0 %v1250
      %1260 = vmatprep.subr.bf16.mxu0 0
      %1261 = vmatpush1.bf16.msra.mxu0 0
      %1262 = vmatprep.subr.bf16.mxu0 0
      %1263 = vmatpush1.bf16.msra.mxu0 0
      %1264 = vmatprep.subr.bf16.mxu0 0
      %1265 = vmatpush1.bf16.msra.mxu0 0
      %1266 = vmatprep.subr.bf16.mxu0 0
      %1267 = vmatpush1.bf16.msra.mxu0 0
      %1268 = vmatprep.subr.bf16.mxu0 0
      %1269 = vmatpush1.bf16.msra.mxu0 0
      %1270 = vmatprep.subr.bf16.mxu0 0
      %1271 = vmatpush1.bf16.msra.mxu0 0
      %1272 = vmatprep.subr.bf16.mxu0 0
      %1273 = vmatpush1.bf16.msra.mxu0 0
      %1274 = vmatprep.subr.bf16.mxu0 0
      %1275 = vmatpush1.bf16.msra.mxu0 0
      %1276 = vmatprep.subr.bf16.mxu0 0
      %1277 = vmatpush1.bf16.msra.mxu0 0
      %1278 = vmatprep.subr.bf16.mxu0 0
      %1279 = vmatpush1.bf16.msra.mxu0 0
      %1280 = vmatprep.subr.bf16.mxu0 0
      %1281 = vmatpush1.bf16.msra.mxu0 0
      %1282 = vmatprep.subr.bf16.mxu0 0
      %1283 = vmatpush1.bf16.msra.mxu0 0
      %1284 = vmatprep.subr.bf16.mxu0 0
      %1285 = vmatpush1.bf16.msra.mxu0 0
      %1286 = vmatprep.subr.bf16.mxu0 0
      %1287 = vmatpush1.bf16.msra.mxu0 0
      %1288 = vmatprep.mubr.bf16.mxu0 0
      %1289 = vmatmul.mubr.bf16.gmra.mrb[0].mxu0 %v1254
      %v1290 = vpop.f32.mrb[0].mxu0
      %v1291 = vadd.f32 %v1239, %v1290
      %v1292 = vpop.f32.mrb[0].mxu0
      %v1293 = vpop.f32.mrb[0].mxu0
      %v1294 = vpop.f32.mrb[0].mxu0
      %1295 = vdwg.mxu0
      %v1296 = vmul.f32 %v1291, 0.5
      %v1297 = vmul.f32 %v1291, 0.044715
      %v1298 = vmul.f32 %v1297, %v1291
      %v1299 = vmul.f32 %v1298, %v1291
      %v1300 = vadd.f32 %v1291, %v1299
      %v1301 = vmul.f32 %v1300, 0.7978846
      %v1302 = vtanh.pop %v1301
      %v1303 = vadd.f32 %v1302, 1.0
      %v1304 = vmul.f32 %v1296, %v1303
      %v1305 = vpack.c.bf16 %v1304, %v1304
      %v1306 = vld [vmem:[%s775] sm:$0xf]
      %v1307 = vld [vmem:[%s775 + $0x4] sm:$0xf]
      %v1308 = vld [vmem:[%s775 + $0x8] sm:$0xf]
      %v1309 = vld [vmem:[%s775 + $0xc] sm:$0xf]
      %v1310 = vld [vmem:[%s775 + $0x10] sm:$0xf]
      %v1311 = vld [vmem:[%s775 + $0x14] sm:$0xf]
      %v1312 = vld [vmem:[%s775 + $0x18] sm:$0xf]
      %v1313 = vld [vmem:[%s775 + $0x1c] sm:$0xf]
      %v1314 = vld [vmem:[%s778] sm:$0x1]
      %v1316 = vlaneseq
      %v1317 = vshrl.u32 %v1316, 7
      %v1318 = vsub.s32 0, %v1317
      %v1319 = vrot.slane %v1314, %v1318
      %v1329 = vunpack.c.l.b16 %v1306
      %v1330 = vunpack.c.l.b16 %v1307
      %v1331 = vunpack.c.l.b16 %v1308
      %v1332 = vunpack.c.l.b16 %v1309
      %v1333 = vunpack.c.l.b16 %v1310
      %v1334 = vunpack.c.l.b16 %v1311
      %v1335 = vunpack.c.l.b16 %v1312
      %v1336 = vunpack.c.l.b16 %v1313
      %v1337 = vpack.c.b16 %v1330, %v1329
      %v1338 = vpack.c.b16 %v1332, %v1331
      %v1339 = vpack.c.b16 %v1334, %v1333
      %v1340 = vpack.c.b16 %v1336, %v1335
      %vm1345 = vcmask 523264
      %v1347 = vsel %vm1345, %v1305, 0
      %1349 = vmatprep.subr.bf16.mxu0 0
      %1350 = vmatpush1.bf16.msra.mxu0 %v1337
      %1351 = vmatprep.subr.bf16.mxu0 0
      %1352 = vmatpush1.bf16.msra.mxu0 %v1338
      %1353 = vmatprep.subr.bf16.mxu0 0
      %1354 = vmatpush1.bf16.msra.mxu0 %v1339
      %1355 = vmatprep.subr.bf16.mxu0 0
      %1356 = vmatpush1.bf16.msra.mxu0 %v1340
      %1357 = vmatprep.subr.bf16.mxu0 0
      %1358 = vmatpush1.bf16.msra.mxu0 0
      %1359 = vmatprep.subr.bf16.mxu0 0
      %1360 = vmatpush1.bf16.msra.mxu0 0
      %1361 = vmatprep.subr.bf16.mxu0 0
      %1362 = vmatpush1.bf16.msra.mxu0 0
      %1363 = vmatprep.subr.bf16.mxu0 0
      %1364 = vmatpush1.bf16.msra.mxu0 0
      %1365 = vmatprep.subr.bf16.mxu0 0
      %1366 = vmatpush1.bf16.msra.mxu0 0
      %1367 = vmatprep.subr.bf16.mxu0 0
      %1368 = vmatpush1.bf16.msra.mxu0 0
      %1369 = vmatprep.subr.bf16.mxu0 0
      %1370 = vmatpush1.bf16.msra.mxu0 0
      %1371 = vmatprep.subr.bf16.mxu0 0
      %1372 = vmatpush1.bf16.msra.mxu0 0
      %1373 = vmatprep.subr.bf16.mxu0 0
      %1374 = vmatpush1.bf16.msra.mxu0 0
      %1375 = vmatprep.subr.bf16.mxu0 0
      %1376 = vmatpush1.bf16.msra.mxu0 0
      %1377 = vmatprep.subr.bf16.mxu0 0
      %1378 = vmatpush1.bf16.msra.mxu0 0
      %1379 = vmatprep.subr.bf16.mxu0 0
      %1380 = vmatpush1.bf16.msra.mxu0 0
      %1381 = vmatprep.mubr.bf16.mxu0 0
      %1382 = vmatmul.mubr.bf16.gmra.mrb[0].mxu0 %v1347
      %v1383 = vpop.f32.mrb[0].mxu0
      %v1384 = vadd.f32 %v1319, %v1383
      %v1385 = vpop.f32.mrb[0].mxu0
      %v1386 = vpop.f32.mrb[0].mxu0
      %v1387 = vpop.f32.mrb[0].mxu0
      %1388 = vdwg.mxu0
      %v1389 = vadd.f32 %v1384, %v1228
      %v1390 = vld [vmem:[%s781] sm:$0x1]
      %v1391 = vld [vmem:[%s784] sm:$0x1]
      %v1392 = vsel %vm853, %v1389, 0.0
      %1393 = vadd.xlane.f32.xlu0 %v1392
      %v1394 = vpop.xlane.xlu0 %1393
      %v1395 = vmul.f32 %v1394, %v1204
      %v1396 = vsub.f32 %v1389, %v1395
      %v1397 = vmul.f32 %v1396, %v1396
      %v1398 = vsel %vm853, %v1397, 0.0
      %1399 = vadd.xlane.f32.xlu0 %v1398
      %v1400 = vpop.xlane.xlu0 %1399
      %v1401 = vmul.f32 %v1400, %v1204
      %v1402 = vadd.f32 %v1401, 1e-12
      %v1403 = vrsqrt.pop %v1402
      %v1404 = vmul.f32 %v1396, %v1403
      %v1406 = vlaneseq
      %v1407 = vshrl.u32 %v1406, 7
      %v1408 = vsub.s32 0, %v1407
      %v1409 = vrot.slane %v1390, %v1408
      %v1411 = vmul.f32 %v1404, %v1409
      %v1413 = vlaneseq
      %v1414 = vshrl.u32 %v1413, 7
      %v1415 = vsub.s32 0, %v1414
      %v1416 = vrot.slane %v1391, %v1415
      %v1418 = vadd.f32 %v1411, %v1416
      %1419 = vst.msk [vmem:[#allocation2] sm:$0xff] %vm853, %v1418
      %p1420 = scmp.eq.s32.totalorder %s34, 1
      // Predicated region
      $region97: #{specter2_forward.1} parent=91 // pred_check
        %p1421 = pneg %p1420
      $region98: #{specter2_forward.1} parent=91 // pred_check_branch
        %1423 = sbr.rel (%p1421) target = $region100
      $region99: #{specter2_forward.1} parent=91 // pred_region
        %v1424 = vpack.c.bf16 %v1418, %v1418
        %v1425 = vld [vmem:[%s16] sm:$0xf]
        %v1426 = vld [vmem:[%s16 + $0x4] sm:$0xf]
        %v1427 = vld [vmem:[%s16 + $0x8] sm:$0xf]
        %v1428 = vld [vmem:[%s16 + $0xc] sm:$0xf]
        %v1429 = vld [vmem:[%s17] sm:$0x1]
        %v1431 = vlaneseq
        %v1432 = vshrl.u32 %v1431, 7
        %v1433 = vsub.s32 0, %v1432
        %v1434 = vrot.slane %v1429, %v1433
        %v1440 = vunpack.c.l.b16 %v1425
        %v1441 = vunpack.c.l.b16 %v1426
        %v1442 = vunpack.c.l.b16 %v1427
        %v1443 = vunpack.c.l.b16 %v1428
        %v1444 = vpack.c.b16 %v1441, %v1440
        %v1445 = vpack.c.b16 %v1443, %v1442
        %v1449 = vsel %vm853, %v1424, 0
        %1451 = vmatprep.subr.bf16.mxu0 0
        %1452 = vmatpush1.bf16.msra.mxu0 %v1444
        %1453 = vmatprep.subr.bf16.mxu0 0
        %1454 = vmatpush1.bf16.msra.mxu0 %v1445
        %1455 = vmatprep.subr.bf16.mxu0 0
        %1456 = vmatpush1.bf16.msra.mxu0 0
        %1457 = vmatprep.subr.bf16.mxu0 0
        %1458 = vmatpush1.bf16.msra.mxu0 0
        %1459 = vmatprep.subr.bf16.mxu0 0
        %1460 = vmatpush1.bf16.msra.mxu0 0
        %1461 = vmatprep.subr.bf16.mxu0 0
        %1462 = vmatpush1.bf16.msra.mxu0 0
        %1463 = vmatprep.subr.bf16.mxu0 0
        %1464 = vmatpush1.bf16.msra.mxu0 0
        %1465 = vmatprep.subr.bf16.mxu0 0
        %1466 = vmatpush1.bf16.msra.mxu0 0
        %1467 = vmatprep.subr.bf16.mxu0 0
        %1468 = vmatpush1.bf16.msra.mxu0 0
        %1469 = vmatprep.subr.bf16.mxu0 0
        %1470 = vmatpush1.bf16.msra.mxu0 0
        %1471 = vmatprep.subr.bf16.mxu0 0
        %1472 = vmatpush1.bf16.msra.mxu0 0
        %1473 = vmatprep.subr.bf16.mxu0 0
        %1474 = vmatpush1.bf16.msra.mxu0 0
        %1475 = vmatprep.subr.bf16.mxu0 0
        %1476 = vmatpush1.bf16.msra.mxu0 0
        %1477 = vmatprep.subr.bf16.mxu0 0
        %1478 = vmatpush1.bf16.msra.mxu0 0
        %1479 = vmatprep.subr.bf16.mxu0 0
        %1480 = vmatpush1.bf16.msra.mxu0 0
        %1481 = vmatprep.subr.bf16.mxu0 0
        %1482 = vmatpush1.bf16.msra.mxu0 0
        %1483 = vmatprep.mubr.bf16.mxu0 0
        %1484 = vmatmul.mubr.bf16.gmra.mrb[0].mxu0 %v1449
        %v1485 = vpop.f32.mrb[0].mxu0
        %v1486 = vadd.f32 %v1434, %v1485
        %v1487 = vpop.f32.mrb[0].mxu0
        %v1488 = vpop.f32.mrb[0].mxu0
        %v1489 = vpop.f32.mrb[0].mxu0
        %1490 = vdwg.mxu0
        %1491 = vst [vmem:[%s788] sm:$0xff] %v1486
      $region100: #{specter2_forward.1} parent=91 // pred_fallthru
        _
      %p1492 = scmp.lt.s32.totalorder %s33, 1
      %s1493 = scalar_select %p1492, %s33, 1
      %s1494 = smul.addr %s1493, 8
      %s1495 = scalar_lea.vmem %s18, %s1494
      // Predicated region
      $region101: #{specter2_forward.1} parent=91 // pred_check
        %p1496 = pneg %p507
      $region102: #{specter2_forward.1} parent=91 // pred_check_branch
        %1498 = sbr.rel (%p1496) target = $region104
      $region103: #{specter2_forward.1} parent=91 // pred_region
        _
      $region104: #{specter2_forward.1} parent=91 // pred_fallthru
        _
    $region92: #{specter2_forward.1} parent=5 // pred_fallthru
      _
    %p1499 = scmp.le.s32.totalorder 2, %s24
    // Predicated region
    $region105: #{specter2_forward.1} parent=5 // pred_check
      %p1500 = pneg %p1499
    $region106: #{specter2_forward.1} parent=5 // pred_check_branch
      %1502 = sbr.rel (%p1500) target = $region108
    $region107: #{specter2_forward.1} parent=5 // pred_region
      %s1503 = ssub.s32 %s24, 2
      // Predicated region
      $region109: #{specter2_forward.1} parent=107 // pred_check
        %p1504 = pneg %p513
      $region110: #{specter2_forward.1} parent=107 // pred_check_branch
        %1506 = sbr.rel (%p1504) target = $region112
      $region111: #{specter2_forward.1} parent=107 // pred_region
        %p1507 = scmp.lt.s32.totalorder %s35, 1
        %s1508 = scalar_select %p1507, %s35, 1
        %s1509 = smul.addr %s1508, 8
        %s1510 = scalar_lea.vmem %s18, %s1509
      $region112: #{specter2_forward.1} parent=107 // pred_fallthru
        _
    $region108: #{specter2_forward.1} parent=5 // pred_fallthru
      _
  $region6: #{specter2_forward.1} parent=0 // loop_footer
    %s28 = sadd.s32 1, %s24
  $region7: #{specter2_forward.1} parent=0 // loop_footer_branch
    %23 = sbr.rel target = $region3
  $region8: #{specter2_forward.1} parent=0 // loop_exit
    _

</llo_original>
